<compile_context>
chip_gen: v7x
topology: tpu7x:2x2x1
jax: 0.10.0
libtpu: 0.0.40
codegen_flags: <defaults>
</compile_context>

<pallas_src>
import math

import jax
import jax.numpy as jnp
from jax import lax
from jax.experimental import pallas as pl
from jax.experimental.pallas import tpu as pltpu

KERNEL_SIZE = 9

# (weight name, bias name, in_ch, out_ch, dilation) in SMEM packing order.
_LAYERS = (
    ("w1", "b1", 1, 2, 1),   # conv1: 1 -> 2, dilation 1
    ("w0", "b0", 1, 2, 8),   # conv0: 1 -> 2, dilation 8
    ("w2", "b2", 2, 2, 2),   # conv2: 2 -> 2, dilation 2
    ("w3", "b3", 2, 2, 4),   # conv3: 2 -> 2, dilation 4
    ("w4", "b4", 2, 2, 8),   # conv4: 2 -> 2, dilation 8
)

_OFFSETS = {}
_off = 0
for _w, _b, _cin, _cout, _d in _LAYERS:
    _OFFSETS[_w] = _off
    _off += _cout * _cin * KERNEL_SIZE
    _OFFSETS[_b] = _off
    _off += _cout
PARAM_LEN = _off                      # 154 floats -> ~1 KiB of SMEM


def pack_params(params):
    """Flatten all conv taps/biases into one f32 vector (static layout)."""
    parts = []
    for w, b, _, _, _ in _LAYERS:
        parts.append(params[w].astype(jnp.float32).reshape(-1))
        parts.append(params[b].astype(jnp.float32).reshape(-1))
    return jnp.concatenate(parts)


# ----------------------------- Pallas kernel ------------------------------ #
def network_noise2_kernel(p_ref, x_ref, means_ref, stds_ref):
    # p_ref : SMEM (PARAM_LEN,) f32 -- all taps + biases (static offsets)
    # x_ref : VMEM (bt, T) f32 -- one batch tile of the single input channel
    bt, T = x_ref.shape

    # Hoist all SMEM scalar reads into one block (keeps sld out of the
    # VALU-critical inner stream; Mosaic may re-materialize if sregs spill).
    p = [p_ref[i] for i in range(PARAM_LEN)]

    x = x_ref[...]

    # One lane-index iota and ONE causal mask per unique dilation, shared by
    # every conv layer / tap (the previous version paid a compare per tap).
    t_idx = lax.broadcasted_iota(jnp.int32, (bt, T), 1)
    masks = {d: (t_idx >= d) for d in (1, 2, 4, 8)}

    def conv_layer(h_list, wname, bname, cin, cout, dilation):
        w_off = _OFFSETS[wname]
        b_off = _OFFSETS[bname]
        mask = masks[dilation]
        # Cumulative causal shifts: maps[j][:, t] = h[:, t - j*dilation]
        # (zero for t < j*dilation).  Each step is one XLU roll by `dilation`
        # plus one select with the fixed per-dilation mask -- no per-tap
        # compares.  Shifted maps are shared across output channels.
        shifted = []
        for c in range(cin):
            maps = [h_list[c]]                     # shift 0
            cur = h_list[c]
            for _ in range(KERNEL_SIZE - 1):
                cur = jnp.where(mask, pltpu.roll(cur, shift=dilation, axis=1),
                                0.0)
                maps.append(cur)
            shifted.append(maps)
        outs = []
        for o in range(cout):
            acc = None
            for c in range(cin):
                base = w_off + (o * cin + c) * KERNEL_SIZE
                for i in range(KERNEL_SIZE):
                    # tap i multiplies input shifted right by (K-1-i)*dilation
                    term = shifted[c][KERNEL_SIZE - 1 - i] * p[base + i]
                    acc = term if acc is None else acc + term
            outs.append(acc + p[b_off + o])        # bias folded once
        return outs

    # Forward (matches NetworkNoise2.forward):
    x1 = conv_layer([x], "w1", "b1", 1, 2, 1)      # conv1(x)
    x2 = conv_layer([x], "w0", "b0", 1, 2, 8)      # conv0(x)
    h = [jnp.tanh(v) for v in x1]                  # tanh1
    h = conv_layer(h, "w2", "b2", 2, 2, 2)         # conv2
    h = [jnp.tanh(v) for v in h]                   # tanh2
    h = conv_layer(h, "w3", "b3", 2, 2, 4)         # conv3
    h = [jnp.tanh(v) for v in h]                   # tanh3
    h = conv_layer(h, "w4", "b4", 2, 2, 8)         # conv4

    out0 = h[0] + x1[0] + x2[0]                    # channel 0 -> means
    out1 = h[1] + x1[1] + x2[1]                    # channel 1 -> log_var
    means_ref[...] = out0
    stds_ref[...] = jnp.exp(0.5 * out1)


# ------------------------------- wrapper ----------------------------------- #
def _vmem_capacity_bytes():
    try:
        cap = int(pltpu.get_tpu_info().vmem_capacity_bytes)
        if cap > 0:
            return cap
    except Exception:
        pass
    return 64 << 20   # conservative default (v7x-sized)


def _pick_batch_tile(B, T, vmem_cap):
    """VMEM- and T-aware batch-tile picker.

    Budget ~1/4 of physical VMEM for the ~30-40 live (bt, T) f32 channel maps
    inside the kernel (this automatically halves the tile budget on v7x's
    64 MiB VMEM vs v5e/v6e's 128 MiB).  Cap at 256: the review found bt in
    64-256 keeps far more of the working set vreg-resident than 512.
    """
    live_maps = 40                                   # conservative live count
    budget = vmem_cap // 4
    max_bt = max(8, budget // (live_maps * T * 4))
    max_bt = min(max_bt, 256)
    bt = B                                           # small/odd batch fallback
    for cand in (256, 128, 64, 32, 16, 8):
        if cand <= max_bt and B % cand == 0:
            bt = cand
            break
    return bt


@jax.jit
def network_noise2_forward(x, cur_gt, params):
    """x: (B, 1, T) float32 NCW (like PyTorch).  cur_gt unused in forward."""
    del cur_gt  # unused by NetworkNoise2.forward as well
    B, C, T = x.shape
    assert C == 1
    x2d = x[:, 0, :].astype(jnp.float32)
    flat_params = pack_params(params)

    vmem_cap = _vmem_capacity_bytes()
    bt = _pick_batch_tile(B, T, vmem_cap)
    grid = (B // bt,)
    # Explicit scoped-VMEM limit: half of physical (32 MiB on v7x, 64 MiB on
    # v5e/v6e), always enough for the live temporaries under the picker above.
    vmem_limit = int(min(vmem_cap // 2, 64 << 20))

    means, stds = pl.pallas_call(
        network_noise2_kernel,
        out_shape=(jax.ShapeDtypeStruct((B, T), jnp.float32),
                   jax.ShapeDtypeStruct((B, T), jnp.float32)),
        grid=grid,
        in_specs=[
            pl.BlockSpec(memory_space=pltpu.MemorySpace.SMEM),   # taps+biases
            pl.BlockSpec((bt, T), lambda b: (b, 0)),             # x tile
        ],
        out_specs=(pl.BlockSpec((bt, T), lambda b: (b, 0)),
                   pl.BlockSpec((bt, T), lambda b: (b, 0))),
        compiler_params=pltpu.CompilerParams(
            dimension_semantics=("parallel",),                   # v7x megacore
            vmem_limit_bytes=vmem_limit),
    )(flat_params, x2d)
    return means, stds


# --------------------------- pure-JAX reference ---------------------------- #
def _ref_causal_conv(x, w, b, dilation):
    B, Cin, T = x.shape
    Cout, _, K = w.shape
    y = jnp.broadcast_to(b[None, :, None], (B, Cout, T)).astype(jnp.float32)
    for o in range(Cout):
        acc = jnp.zeros((B, T), jnp.float32)
        for c in range(Cin):
            for i in range(K):
                s = (K - 1 - i) * dilation
                xc = x[:, c, :]
                shifted = jnp.pad(xc, ((0, 0), (s, 0)))[:, :T] if s > 0 else xc
                acc = acc + w[o, c, i] * shifted
        y = y.at[:, o, :].add(acc)
    return y


def ref_forward(x, params):
    x1 = _ref_causal_conv(x, params["w1"], params["b1"], 1)
    x2 = _ref_causal_conv(x, params["w0"], params["b0"], 8)
    h = jnp.tanh(x1)
    h = _ref_causal_conv(h, params["w2"], params["b2"], 2)
    h = jnp.tanh(h)
    h = _ref_causal_conv(h, params["w3"], params["b3"], 4)
    h = jnp.tanh(h)
    h = _ref_causal_conv(h, params["w4"], params["b4"], 8)
    out = h + x1 + x2
    return out[:, 0, :], jnp.exp(0.5 * out[:, 1, :])


# ---------------------------------- main ----------------------------------- #
def init_params(key, k=KERNEL_SIZE):
    # PyTorch-Conv1d-style uniform(-1/sqrt(fan_in), 1/sqrt(fan_in)).
    def conv_init(kw, kb, out_ch, in_ch):
        bound = 1.0 / math.sqrt(in_ch * k)
        w = jax.random.uniform(kw, (out_ch, in_ch, k), jnp.float32, -bound, bound)
        b = jax.random.uniform(kb, (out_ch,), jnp.float32, -bound, bound)
        return w, b

    ks = jax.random.split(key, 10)
    w0, b0 = conv_init(ks[0], ks[1], 2, 1)
    w1, b1 = conv_init(ks[2], ks[3], 2, 1)
    w2, b2 = conv_init(ks[4], ks[5], 2, 2)
    w3, b3 = conv_init(ks[6], ks[7], 2, 2)
    w4, b4 = conv_init(ks[8], ks[9], 2, 2)
    return dict(w0=w0, b0=b0, w1=w1, b1=b1, w2=w2, b2=b2,
                w3=w3, b3=b3, w4=w4, b4=b4)


if __name__ == "__main__":
    key = jax.random.PRNGKey(0)
    k_param, k_x, k_gt, k_x2 = jax.random.split(key, 4)

    params = init_params(k_param)

    # ---- demo shape (B=2, T=128): single tile, single program ----
    B, T = 2, 128
    x = jax.random.normal(k_x, (B, 1, T), jnp.float32)
    cur_gt = jax.random.normal(k_gt, (B, 1, T), jnp.float32)  # unused in forward

    means, stds = network_noise2_forward(x, cur_gt, params)
    means, stds = jax.block_until_ready((means, stds))

    ref_means, ref_stds = ref_forward(x, params)
    assert means.shape == (B, T) and stds.shape == (B, T)
    assert jnp.max(jnp.abs(means - ref_means)) < 1e-3, "means mismatch"
    assert jnp.max(jnp.abs(stds - ref_stds)) < 1e-3, "stds mismatch"

    # ---- larger batch: exercises the multi-tile grid / pipelined path ----
    B2 = 512
    x_big = jax.random.normal(k_x2, (B2, 1, T), jnp.float32)
    means2, stds2 = network_noise2_forward(x_big, jnp.zeros_like(x_big), params)
    means2, stds2 = jax.block_until_ready((means2, stds2))
    ref_means2, ref_stds2 = ref_forward(x_big, params)
    assert jnp.max(jnp.abs(means2 - ref_means2)) < 1e-3, "means mismatch (big)"
    assert jnp.max(jnp.abs(stds2 - ref_stds2)) < 1e-3, "stds mismatch (big)"

    # TODO(synk): calc_model_likelihood / casual_loss are loss-side utilities,
    # not part of the forward pass; they are not implemented as kernels.
    print("KERNEL_OK")
</pallas_src>

<mosaic_0001>
module attributes {stable_mosaic.version = 11 : i64} {
  func.func @network_noise2_kernel(%arg0: i32, %arg1: memref<154xf32, #tpu.memory_space<smem>>, %arg2: memref<2x128xf32, #tpu.memory_space<vmem>>, %arg3: memref<2x128xf32, #tpu.memory_space<vmem>>, %arg4: memref<2x128xf32, #tpu.memory_space<vmem>>) attributes {dimension_semantics = [#tpu.dimension_semantics<parallel>], iteration_bounds = array<i64: 1>, scalar_prefetch = 0 : i64, scratch_operands = 0 : i64, tpu.core_type = #tpu.core_type<tc>, window_params = [{transform_indices = @transform_0, window_bounds = array<i64: 154>}, {transform_indices = @transform_1, window_bounds = array<i64: 2, 128>}, {transform_indices = @transform_2, window_bounds = array<i64: 2, 128>}, {transform_indices = @transform_3, window_bounds = array<i64: 2, 128>}]} {
    %c0 = arith.constant 0 : index
    %0 = memref.load %arg1[%c0] : memref<154xf32, #tpu.memory_space<smem>>
    %c1 = arith.constant 1 : index
    %1 = memref.load %arg1[%c1] : memref<154xf32, #tpu.memory_space<smem>>
    %c2 = arith.constant 2 : index
    %2 = memref.load %arg1[%c2] : memref<154xf32, #tpu.memory_space<smem>>
    %c3 = arith.constant 3 : index
    %3 = memref.load %arg1[%c3] : memref<154xf32, #tpu.memory_space<smem>>
    %c4 = arith.constant 4 : index
    %4 = memref.load %arg1[%c4] : memref<154xf32, #tpu.memory_space<smem>>
    %c5 = arith.constant 5 : index
    %5 = memref.load %arg1[%c5] : memref<154xf32, #tpu.memory_space<smem>>
    %c6 = arith.constant 6 : index
    %6 = memref.load %arg1[%c6] : memref<154xf32, #tpu.memory_space<smem>>
    %c7 = arith.constant 7 : index
    %7 = memref.load %arg1[%c7] : memref<154xf32, #tpu.memory_space<smem>>
    %c8 = arith.constant 8 : index
    %8 = memref.load %arg1[%c8] : memref<154xf32, #tpu.memory_space<smem>>
    %c9 = arith.constant 9 : index
    %9 = memref.load %arg1[%c9] : memref<154xf32, #tpu.memory_space<smem>>
    %c10 = arith.constant 10 : index
    %10 = memref.load %arg1[%c10] : memref<154xf32, #tpu.memory_space<smem>>
    %c11 = arith.constant 11 : index
    %11 = memref.load %arg1[%c11] : memref<154xf32, #tpu.memory_space<smem>>
    %c12 = arith.constant 12 : index
    %12 = memref.load %arg1[%c12] : memref<154xf32, #tpu.memory_space<smem>>
    %c13 = arith.constant 13 : index
    %13 = memref.load %arg1[%c13] : memref<154xf32, #tpu.memory_space<smem>>
    %c14 = arith.constant 14 : index
    %14 = memref.load %arg1[%c14] : memref<154xf32, #tpu.memory_space<smem>>
    %c15 = arith.constant 15 : index
    %15 = memref.load %arg1[%c15] : memref<154xf32, #tpu.memory_space<smem>>
    %c16 = arith.constant 16 : index
    %16 = memref.load %arg1[%c16] : memref<154xf32, #tpu.memory_space<smem>>
    %c17 = arith.constant 17 : index
    %17 = memref.load %arg1[%c17] : memref<154xf32, #tpu.memory_space<smem>>
    %c18 = arith.constant 18 : index
    %18 = memref.load %arg1[%c18] : memref<154xf32, #tpu.memory_space<smem>>
    %c19 = arith.constant 19 : index
    %19 = memref.load %arg1[%c19] : memref<154xf32, #tpu.memory_space<smem>>
    %c20 = arith.constant 20 : index
    %20 = memref.load %arg1[%c20] : memref<154xf32, #tpu.memory_space<smem>>
    %c21 = arith.constant 21 : index
    %21 = memref.load %arg1[%c21] : memref<154xf32, #tpu.memory_space<smem>>
    %c22 = arith.constant 22 : index
    %22 = memref.load %arg1[%c22] : memref<154xf32, #tpu.memory_space<smem>>
    %c23 = arith.constant 23 : index
    %23 = memref.load %arg1[%c23] : memref<154xf32, #tpu.memory_space<smem>>
    %c24 = arith.constant 24 : index
    %24 = memref.load %arg1[%c24] : memref<154xf32, #tpu.memory_space<smem>>
    %c25 = arith.constant 25 : index
    %25 = memref.load %arg1[%c25] : memref<154xf32, #tpu.memory_space<smem>>
    %c26 = arith.constant 26 : index
    %26 = memref.load %arg1[%c26] : memref<154xf32, #tpu.memory_space<smem>>
    %c27 = arith.constant 27 : index
    %27 = memref.load %arg1[%c27] : memref<154xf32, #tpu.memory_space<smem>>
    %c28 = arith.constant 28 : index
    %28 = memref.load %arg1[%c28] : memref<154xf32, #tpu.memory_space<smem>>
    %c29 = arith.constant 29 : index
    %29 = memref.load %arg1[%c29] : memref<154xf32, #tpu.memory_space<smem>>
    %c30 = arith.constant 30 : index
    %30 = memref.load %arg1[%c30] : memref<154xf32, #tpu.memory_space<smem>>
    %c31 = arith.constant 31 : index
    %31 = memref.load %arg1[%c31] : memref<154xf32, #tpu.memory_space<smem>>
    %c32 = arith.constant 32 : index
    %32 = memref.load %arg1[%c32] : memref<154xf32, #tpu.memory_space<smem>>
    %c33 = arith.constant 33 : index
    %33 = memref.load %arg1[%c33] : memref<154xf32, #tpu.memory_space<smem>>
    %c34 = arith.constant 34 : index
    %34 = memref.load %arg1[%c34] : memref<154xf32, #tpu.memory_space<smem>>
    %c35 = arith.constant 35 : index
    %35 = memref.load %arg1[%c35] : memref<154xf32, #tpu.memory_space<smem>>
    %c36 = arith.constant 36 : index
    %36 = memref.load %arg1[%c36] : memref<154xf32, #tpu.memory_space<smem>>
    %c37 = arith.constant 37 : index
    %37 = memref.load %arg1[%c37] : memref<154xf32, #tpu.memory_space<smem>>
    %c38 = arith.constant 38 : index
    %38 = memref.load %arg1[%c38] : memref<154xf32, #tpu.memory_space<smem>>
    %c39 = arith.constant 39 : index
    %39 = memref.load %arg1[%c39] : memref<154xf32, #tpu.memory_space<smem>>
    %c40 = arith.constant 40 : index
    %40 = memref.load %arg1[%c40] : memref<154xf32, #tpu.memory_space<smem>>
    %c41 = arith.constant 41 : index
    %41 = memref.load %arg1[%c41] : memref<154xf32, #tpu.memory_space<smem>>
    %c42 = arith.constant 42 : index
    %42 = memref.load %arg1[%c42] : memref<154xf32, #tpu.memory_space<smem>>
    %c43 = arith.constant 43 : index
    %43 = memref.load %arg1[%c43] : memref<154xf32, #tpu.memory_space<smem>>
    %c44 = arith.constant 44 : index
    %44 = memref.load %arg1[%c44] : memref<154xf32, #tpu.memory_space<smem>>
    %c45 = arith.constant 45 : index
    %45 = memref.load %arg1[%c45] : memref<154xf32, #tpu.memory_space<smem>>
    %c46 = arith.constant 46 : index
    %46 = memref.load %arg1[%c46] : memref<154xf32, #tpu.memory_space<smem>>
    %c47 = arith.constant 47 : index
    %47 = memref.load %arg1[%c47] : memref<154xf32, #tpu.memory_space<smem>>
    %c48 = arith.constant 48 : index
    %48 = memref.load %arg1[%c48] : memref<154xf32, #tpu.memory_space<smem>>
    %c49 = arith.constant 49 : index
    %49 = memref.load %arg1[%c49] : memref<154xf32, #tpu.memory_space<smem>>
    %c50 = arith.constant 50 : index
    %50 = memref.load %arg1[%c50] : memref<154xf32, #tpu.memory_space<smem>>
    %c51 = arith.constant 51 : index
    %51 = memref.load %arg1[%c51] : memref<154xf32, #tpu.memory_space<smem>>
    %c52 = arith.constant 52 : index
    %52 = memref.load %arg1[%c52] : memref<154xf32, #tpu.memory_space<smem>>
    %c53 = arith.constant 53 : index
    %53 = memref.load %arg1[%c53] : memref<154xf32, #tpu.memory_space<smem>>
    %c54 = arith.constant 54 : index
    %54 = memref.load %arg1[%c54] : memref<154xf32, #tpu.memory_space<smem>>
    %c55 = arith.constant 55 : index
    %55 = memref.load %arg1[%c55] : memref<154xf32, #tpu.memory_space<smem>>
    %c56 = arith.constant 56 : index
    %56 = memref.load %arg1[%c56] : memref<154xf32, #tpu.memory_space<smem>>
    %c57 = arith.constant 57 : index
    %57 = memref.load %arg1[%c57] : memref<154xf32, #tpu.memory_space<smem>>
    %c58 = arith.constant 58 : index
    %58 = memref.load %arg1[%c58] : memref<154xf32, #tpu.memory_space<smem>>
    %c59 = arith.constant 59 : index
    %59 = memref.load %arg1[%c59] : memref<154xf32, #tpu.memory_space<smem>>
    %c60 = arith.constant 60 : index
    %60 = memref.load %arg1[%c60] : memref<154xf32, #tpu.memory_space<smem>>
    %c61 = arith.constant 61 : index
    %61 = memref.load %arg1[%c61] : memref<154xf32, #tpu.memory_space<smem>>
    %c62 = arith.constant 62 : index
    %62 = memref.load %arg1[%c62] : memref<154xf32, #tpu.memory_space<smem>>
    %c63 = arith.constant 63 : index
    %63 = memref.load %arg1[%c63] : memref<154xf32, #tpu.memory_space<smem>>
    %c64 = arith.constant 64 : index
    %64 = memref.load %arg1[%c64] : memref<154xf32, #tpu.memory_space<smem>>
    %c65 = arith.constant 65 : index
    %65 = memref.load %arg1[%c65] : memref<154xf32, #tpu.memory_space<smem>>
    %c66 = arith.constant 66 : index
    %66 = memref.load %arg1[%c66] : memref<154xf32, #tpu.memory_space<smem>>
    %c67 = arith.constant 67 : index
    %67 = memref.load %arg1[%c67] : memref<154xf32, #tpu.memory_space<smem>>
    %c68 = arith.constant 68 : index
    %68 = memref.load %arg1[%c68] : memref<154xf32, #tpu.memory_space<smem>>
    %c69 = arith.constant 69 : index
    %69 = memref.load %arg1[%c69] : memref<154xf32, #tpu.memory_space<smem>>
    %c70 = arith.constant 70 : index
    %70 = memref.load %arg1[%c70] : memref<154xf32, #tpu.memory_space<smem>>
    %c71 = arith.constant 71 : index
    %71 = memref.load %arg1[%c71] : memref<154xf32, #tpu.memory_space<smem>>
    %c72 = arith.constant 72 : index
    %72 = memref.load %arg1[%c72] : memref<154xf32, #tpu.memory_space<smem>>
    %c73 = arith.constant 73 : index
    %73 = memref.load %arg1[%c73] : memref<154xf32, #tpu.memory_space<smem>>
    %c74 = arith.constant 74 : index
    %74 = memref.load %arg1[%c74] : memref<154xf32, #tpu.memory_space<smem>>
    %c75 = arith.constant 75 : index
    %75 = memref.load %arg1[%c75] : memref<154xf32, #tpu.memory_space<smem>>
    %c76 = arith.constant 76 : index
    %76 = memref.load %arg1[%c76] : memref<154xf32, #tpu.memory_space<smem>>
    %c77 = arith.constant 77 : index
    %77 = memref.load %arg1[%c77] : memref<154xf32, #tpu.memory_space<smem>>
    %c78 = arith.constant 78 : index
    %78 = memref.load %arg1[%c78] : memref<154xf32, #tpu.memory_space<smem>>
    %c79 = arith.constant 79 : index
    %79 = memref.load %arg1[%c79] : memref<154xf32, #tpu.memory_space<smem>>
    %c80 = arith.constant 80 : index
    %80 = memref.load %arg1[%c80] : memref<154xf32, #tpu.memory_space<smem>>
    %c81 = arith.constant 81 : index
    %81 = memref.load %arg1[%c81] : memref<154xf32, #tpu.memory_space<smem>>
    %c82 = arith.constant 82 : index
    %82 = memref.load %arg1[%c82] : memref<154xf32, #tpu.memory_space<smem>>
    %c83 = arith.constant 83 : index
    %83 = memref.load %arg1[%c83] : memref<154xf32, #tpu.memory_space<smem>>
    %c84 = arith.constant 84 : index
    %84 = memref.load %arg1[%c84] : memref<154xf32, #tpu.memory_space<smem>>
    %c85 = arith.constant 85 : index
    %85 = memref.load %arg1[%c85] : memref<154xf32, #tpu.memory_space<smem>>
    %c86 = arith.constant 86 : index
    %86 = memref.load %arg1[%c86] : memref<154xf32, #tpu.memory_space<smem>>
    %c87 = arith.constant 87 : index
    %87 = memref.load %arg1[%c87] : memref<154xf32, #tpu.memory_space<smem>>
    %c88 = arith.constant 88 : index
    %88 = memref.load %arg1[%c88] : memref<154xf32, #tpu.memory_space<smem>>
    %c89 = arith.constant 89 : index
    %89 = memref.load %arg1[%c89] : memref<154xf32, #tpu.memory_space<smem>>
    %c90 = arith.constant 90 : index
    %90 = memref.load %arg1[%c90] : memref<154xf32, #tpu.memory_space<smem>>
    %c91 = arith.constant 91 : index
    %91 = memref.load %arg1[%c91] : memref<154xf32, #tpu.memory_space<smem>>
    %c92 = arith.constant 92 : index
    %92 = memref.load %arg1[%c92] : memref<154xf32, #tpu.memory_space<smem>>
    %c93 = arith.constant 93 : index
    %93 = memref.load %arg1[%c93] : memref<154xf32, #tpu.memory_space<smem>>
    %c94 = arith.constant 94 : index
    %94 = memref.load %arg1[%c94] : memref<154xf32, #tpu.memory_space<smem>>
    %c95 = arith.constant 95 : index
    %95 = memref.load %arg1[%c95] : memref<154xf32, #tpu.memory_space<smem>>
    %c96 = arith.constant 96 : index
    %96 = memref.load %arg1[%c96] : memref<154xf32, #tpu.memory_space<smem>>
    %c97 = arith.constant 97 : index
    %97 = memref.load %arg1[%c97] : memref<154xf32, #tpu.memory_space<smem>>
    %c98 = arith.constant 98 : index
    %98 = memref.load %arg1[%c98] : memref<154xf32, #tpu.memory_space<smem>>
    %c99 = arith.constant 99 : index
    %99 = memref.load %arg1[%c99] : memref<154xf32, #tpu.memory_space<smem>>
    %c100 = arith.constant 100 : index
    %100 = memref.load %arg1[%c100] : memref<154xf32, #tpu.memory_space<smem>>
    %c101 = arith.constant 101 : index
    %101 = memref.load %arg1[%c101] : memref<154xf32, #tpu.memory_space<smem>>
    %c102 = arith.constant 102 : index
    %102 = memref.load %arg1[%c102] : memref<154xf32, #tpu.memory_space<smem>>
    %c103 = arith.constant 103 : index
    %103 = memref.load %arg1[%c103] : memref<154xf32, #tpu.memory_space<smem>>
    %c104 = arith.constant 104 : index
    %104 = memref.load %arg1[%c104] : memref<154xf32, #tpu.memory_space<smem>>
    %c105 = arith.constant 105 : index
    %105 = memref.load %arg1[%c105] : memref<154xf32, #tpu.memory_space<smem>>
    %c106 = arith.constant 106 : index
    %106 = memref.load %arg1[%c106] : memref<154xf32, #tpu.memory_space<smem>>
    %c107 = arith.constant 107 : index
    %107 = memref.load %arg1[%c107] : memref<154xf32, #tpu.memory_space<smem>>
    %c108 = arith.constant 108 : index
    %108 = memref.load %arg1[%c108] : memref<154xf32, #tpu.memory_space<smem>>
    %c109 = arith.constant 109 : index
    %109 = memref.load %arg1[%c109] : memref<154xf32, #tpu.memory_space<smem>>
    %c110 = arith.constant 110 : index
    %110 = memref.load %arg1[%c110] : memref<154xf32, #tpu.memory_space<smem>>
    %c111 = arith.constant 111 : index
    %111 = memref.load %arg1[%c111] : memref<154xf32, #tpu.memory_space<smem>>
    %c112 = arith.constant 112 : index
    %112 = memref.load %arg1[%c112] : memref<154xf32, #tpu.memory_space<smem>>
    %c113 = arith.constant 113 : index
    %113 = memref.load %arg1[%c113] : memref<154xf32, #tpu.memory_space<smem>>
    %c114 = arith.constant 114 : index
    %114 = memref.load %arg1[%c114] : memref<154xf32, #tpu.memory_space<smem>>
    %c115 = arith.constant 115 : index
    %115 = memref.load %arg1[%c115] : memref<154xf32, #tpu.memory_space<smem>>
    %c116 = arith.constant 116 : index
    %116 = memref.load %arg1[%c116] : memref<154xf32, #tpu.memory_space<smem>>
    %c117 = arith.constant 117 : index
    %117 = memref.load %arg1[%c117] : memref<154xf32, #tpu.memory_space<smem>>
    %c118 = arith.constant 118 : index
    %118 = memref.load %arg1[%c118] : memref<154xf32, #tpu.memory_space<smem>>
    %c119 = arith.constant 119 : index
    %119 = memref.load %arg1[%c119] : memref<154xf32, #tpu.memory_space<smem>>
    %c120 = arith.constant 120 : index
    %120 = memref.load %arg1[%c120] : memref<154xf32, #tpu.memory_space<smem>>
    %c121 = arith.constant 121 : index
    %121 = memref.load %arg1[%c121] : memref<154xf32, #tpu.memory_space<smem>>
    %c122 = arith.constant 122 : index
    %122 = memref.load %arg1[%c122] : memref<154xf32, #tpu.memory_space<smem>>
    %c123 = arith.constant 123 : index
    %123 = memref.load %arg1[%c123] : memref<154xf32, #tpu.memory_space<smem>>
    %c124 = arith.constant 124 : index
    %124 = memref.load %arg1[%c124] : memref<154xf32, #tpu.memory_space<smem>>
    %c125 = arith.constant 125 : index
    %125 = memref.load %arg1[%c125] : memref<154xf32, #tpu.memory_space<smem>>
    %c126 = arith.constant 126 : index
    %126 = memref.load %arg1[%c126] : memref<154xf32, #tpu.memory_space<smem>>
    %c127 = arith.constant 127 : index
    %127 = memref.load %arg1[%c127] : memref<154xf32, #tpu.memory_space<smem>>
    %c128 = arith.constant 128 : index
    %128 = memref.load %arg1[%c128] : memref<154xf32, #tpu.memory_space<smem>>
    %c129 = arith.constant 129 : index
    %129 = memref.load %arg1[%c129] : memref<154xf32, #tpu.memory_space<smem>>
    %c130 = arith.constant 130 : index
    %130 = memref.load %arg1[%c130] : memref<154xf32, #tpu.memory_space<smem>>
    %c131 = arith.constant 131 : index
    %131 = memref.load %arg1[%c131] : memref<154xf32, #tpu.memory_space<smem>>
    %c132 = arith.constant 132 : index
    %132 = memref.load %arg1[%c132] : memref<154xf32, #tpu.memory_space<smem>>
    %c133 = arith.constant 133 : index
    %133 = memref.load %arg1[%c133] : memref<154xf32, #tpu.memory_space<smem>>
    %c134 = arith.constant 134 : index
    %134 = memref.load %arg1[%c134] : memref<154xf32, #tpu.memory_space<smem>>
    %c135 = arith.constant 135 : index
    %135 = memref.load %arg1[%c135] : memref<154xf32, #tpu.memory_space<smem>>
    %c136 = arith.constant 136 : index
    %136 = memref.load %arg1[%c136] : memref<154xf32, #tpu.memory_space<smem>>
    %c137 = arith.constant 137 : index
    %137 = memref.load %arg1[%c137] : memref<154xf32, #tpu.memory_space<smem>>
    %c138 = arith.constant 138 : index
    %138 = memref.load %arg1[%c138] : memref<154xf32, #tpu.memory_space<smem>>
    %c139 = arith.constant 139 : index
    %139 = memref.load %arg1[%c139] : memref<154xf32, #tpu.memory_space<smem>>
    %c140 = arith.constant 140 : index
    %140 = memref.load %arg1[%c140] : memref<154xf32, #tpu.memory_space<smem>>
    %c141 = arith.constant 141 : index
    %141 = memref.load %arg1[%c141] : memref<154xf32, #tpu.memory_space<smem>>
    %c142 = arith.constant 142 : index
    %142 = memref.load %arg1[%c142] : memref<154xf32, #tpu.memory_space<smem>>
    %c143 = arith.constant 143 : index
    %143 = memref.load %arg1[%c143] : memref<154xf32, #tpu.memory_space<smem>>
    %c144 = arith.constant 144 : index
    %144 = memref.load %arg1[%c144] : memref<154xf32, #tpu.memory_space<smem>>
    %c145 = arith.constant 145 : index
    %145 = memref.load %arg1[%c145] : memref<154xf32, #tpu.memory_space<smem>>
    %c146 = arith.constant 146 : index
    %146 = memref.load %arg1[%c146] : memref<154xf32, #tpu.memory_space<smem>>
    %c147 = arith.constant 147 : index
    %147 = memref.load %arg1[%c147] : memref<154xf32, #tpu.memory_space<smem>>
    %c148 = arith.constant 148 : index
    %148 = memref.load %arg1[%c148] : memref<154xf32, #tpu.memory_space<smem>>
    %c149 = arith.constant 149 : index
    %149 = memref.load %arg1[%c149] : memref<154xf32, #tpu.memory_space<smem>>
    %c150 = arith.constant 150 : index
    %150 = memref.load %arg1[%c150] : memref<154xf32, #tpu.memory_space<smem>>
    %c151 = arith.constant 151 : index
    %151 = memref.load %arg1[%c151] : memref<154xf32, #tpu.memory_space<smem>>
    %c152 = arith.constant 152 : index
    %152 = memref.load %arg1[%c152] : memref<154xf32, #tpu.memory_space<smem>>
    %c153 = arith.constant 153 : index
    %153 = memref.load %arg1[%c153] : memref<154xf32, #tpu.memory_space<smem>>
    %c0_0 = arith.constant 0 : index
    %c0_1 = arith.constant 0 : index
    %154 = vector.load %arg2[%c0_0, %c0_1] : memref<2x128xf32, #tpu.memory_space<vmem>>, vector<2x128xf32>
    %155 = tpu.iota {dimensions = array<i32: 1>} : vector<2x128xi32>
    %c1_i32 = arith.constant 1 : i32
    %156 = vector.broadcast %c1_i32 : i32 to vector<2x128xi32>
    %157 = arith.cmpi sge, %155, %156 : vector<2x128xi32>
    %c2_i32 = arith.constant 2 : i32
    %158 = vector.broadcast %c2_i32 : i32 to vector<2x128xi32>
    %159 = arith.cmpi sge, %155, %158 : vector<2x128xi32>
    %c4_i32 = arith.constant 4 : i32
    %160 = vector.broadcast %c4_i32 : i32 to vector<2x128xi32>
    %161 = arith.cmpi sge, %155, %160 : vector<2x128xi32>
    %c8_i32 = arith.constant 8 : i32
    %162 = vector.broadcast %c8_i32 : i32 to vector<2x128xi32>
    %163 = arith.cmpi sge, %155, %162 : vector<2x128xi32>
    %c1_i32_2 = arith.constant 1 : i32
    %164 = tpu.dynamic_rotate %154 by %c1_i32_2 dim 1 : vector<2x128xf32>, i32 -> vector<2x128xf32>
    %cst = arith.constant 0.000000e+00 : f32
    %165 = vector.broadcast %cst : f32 to vector<2x128xf32>
    %166 = arith.select %157, %164, %165 : vector<2x128xi1>, vector<2x128xf32>
    %c1_i32_3 = arith.constant 1 : i32
    %167 = tpu.dynamic_rotate %166 by %c1_i32_3 dim 1 : vector<2x128xf32>, i32 -> vector<2x128xf32>
    %cst_4 = arith.constant 0.000000e+00 : f32
    %168 = vector.broadcast %cst_4 : f32 to vector<2x128xf32>
    %169 = arith.select %157, %167, %168 : vector<2x128xi1>, vector<2x128xf32>
    %c1_i32_5 = arith.constant 1 : i32
    %170 = tpu.dynamic_rotate %169 by %c1_i32_5 dim 1 : vector<2x128xf32>, i32 -> vector<2x128xf32>
    %cst_6 = arith.constant 0.000000e+00 : f32
    %171 = vector.broadcast %cst_6 : f32 to vector<2x128xf32>
    %172 = arith.select %157, %170, %171 : vector<2x128xi1>, vector<2x128xf32>
    %c1_i32_7 = arith.constant 1 : i32
    %173 = tpu.dynamic_rotate %172 by %c1_i32_7 dim 1 : vector<2x128xf32>, i32 -> vector<2x128xf32>
    %cst_8 = arith.constant 0.000000e+00 : f32
    %174 = vector.broadcast %cst_8 : f32 to vector<2x128xf32>
    %175 = arith.select %157, %173, %174 : vector<2x128xi1>, vector<2x128xf32>
    %c1_i32_9 = arith.constant 1 : i32
    %176 = tpu.dynamic_rotate %175 by %c1_i32_9 dim 1 : vector<2x128xf32>, i32 -> vector<2x128xf32>
    %cst_10 = arith.constant 0.000000e+00 : f32
    %177 = vector.broadcast %cst_10 : f32 to vector<2x128xf32>
    %178 = arith.select %157, %176, %177 : vector<2x128xi1>, vector<2x128xf32>
    %c1_i32_11 = arith.constant 1 : i32
    %179 = tpu.dynamic_rotate %178 by %c1_i32_11 dim 1 : vector<2x128xf32>, i32 -> vector<2x128xf32>
    %cst_12 = arith.constant 0.000000e+00 : f32
    %180 = vector.broadcast %cst_12 : f32 to vector<2x128xf32>
    %181 = arith.select %157, %179, %180 : vector<2x128xi1>, vector<2x128xf32>
    %c1_i32_13 = arith.constant 1 : i32
    %182 = tpu.dynamic_rotate %181 by %c1_i32_13 dim 1 : vector<2x128xf32>, i32 -> vector<2x128xf32>
    %cst_14 = arith.constant 0.000000e+00 : f32
    %183 = vector.broadcast %cst_14 : f32 to vector<2x128xf32>
    %184 = arith.select %157, %182, %183 : vector<2x128xi1>, vector<2x128xf32>
    %c1_i32_15 = arith.constant 1 : i32
    %185 = tpu.dynamic_rotate %184 by %c1_i32_15 dim 1 : vector<2x128xf32>, i32 -> vector<2x128xf32>
    %cst_16 = arith.constant 0.000000e+00 : f32
    %186 = vector.broadcast %cst_16 : f32 to vector<2x128xf32>
    %187 = arith.select %157, %185, %186 : vector<2x128xi1>, vector<2x128xf32>
    %188 = vector.broadcast %0 : f32 to vector<2x128xf32>
    %189 = arith.mulf %187, %188 : vector<2x128xf32>
    %190 = vector.broadcast %1 : f32 to vector<2x128xf32>
    %191 = arith.mulf %184, %190 : vector<2x128xf32>
    %192 = arith.addf %189, %191 : vector<2x128xf32>
    %193 = vector.broadcast %2 : f32 to vector<2x128xf32>
    %194 = arith.mulf %181, %193 : vector<2x128xf32>
    %195 = arith.addf %192, %194 : vector<2x128xf32>
    %196 = vector.broadcast %3 : f32 to vector<2x128xf32>
    %197 = arith.mulf %178, %196 : vector<2x128xf32>
    %198 = arith.addf %195, %197 : vector<2x128xf32>
    %199 = vector.broadcast %4 : f32 to vector<2x128xf32>
    %200 = arith.mulf %175, %199 : vector<2x128xf32>
    %201 = arith.addf %198, %200 : vector<2x128xf32>
    %202 = vector.broadcast %5 : f32 to vector<2x128xf32>
    %203 = arith.mulf %172, %202 : vector<2x128xf32>
    %204 = arith.addf %201, %203 : vector<2x128xf32>
    %205 = vector.broadcast %6 : f32 to vector<2x128xf32>
    %206 = arith.mulf %169, %205 : vector<2x128xf32>
    %207 = arith.addf %204, %206 : vector<2x128xf32>
    %208 = vector.broadcast %7 : f32 to vector<2x128xf32>
    %209 = arith.mulf %166, %208 : vector<2x128xf32>
    %210 = arith.addf %207, %209 : vector<2x128xf32>
    %211 = vector.broadcast %8 : f32 to vector<2x128xf32>
    %212 = arith.mulf %154, %211 : vector<2x128xf32>
    %213 = arith.addf %210, %212 : vector<2x128xf32>
    %214 = vector.broadcast %18 : f32 to vector<2x128xf32>
    %215 = arith.addf %213, %214 : vector<2x128xf32>
    %216 = vector.broadcast %9 : f32 to vector<2x128xf32>
    %217 = arith.mulf %187, %216 : vector<2x128xf32>
    %218 = vector.broadcast %10 : f32 to vector<2x128xf32>
    %219 = arith.mulf %184, %218 : vector<2x128xf32>
    %220 = arith.addf %217, %219 : vector<2x128xf32>
    %221 = vector.broadcast %11 : f32 to vector<2x128xf32>
    %222 = arith.mulf %181, %221 : vector<2x128xf32>
    %223 = arith.addf %220, %222 : vector<2x128xf32>
    %224 = vector.broadcast %12 : f32 to vector<2x128xf32>
    %225 = arith.mulf %178, %224 : vector<2x128xf32>
    %226 = arith.addf %223, %225 : vector<2x128xf32>
    %227 = vector.broadcast %13 : f32 to vector<2x128xf32>
    %228 = arith.mulf %175, %227 : vector<2x128xf32>
    %229 = arith.addf %226, %228 : vector<2x128xf32>
    %230 = vector.broadcast %14 : f32 to vector<2x128xf32>
    %231 = arith.mulf %172, %230 : vector<2x128xf32>
    %232 = arith.addf %229, %231 : vector<2x128xf32>
    %233 = vector.broadcast %15 : f32 to vector<2x128xf32>
    %234 = arith.mulf %169, %233 : vector<2x128xf32>
    %235 = arith.addf %232, %234 : vector<2x128xf32>
    %236 = vector.broadcast %16 : f32 to vector<2x128xf32>
    %237 = arith.mulf %166, %236 : vector<2x128xf32>
    %238 = arith.addf %235, %237 : vector<2x128xf32>
    %239 = vector.broadcast %17 : f32 to vector<2x128xf32>
    %240 = arith.mulf %154, %239 : vector<2x128xf32>
    %241 = arith.addf %238, %240 : vector<2x128xf32>
    %242 = vector.broadcast %19 : f32 to vector<2x128xf32>
    %243 = arith.addf %241, %242 : vector<2x128xf32>
    %c8_i32_17 = arith.constant 8 : i32
    %244 = tpu.dynamic_rotate %154 by %c8_i32_17 dim 1 : vector<2x128xf32>, i32 -> vector<2x128xf32>
    %cst_18 = arith.constant 0.000000e+00 : f32
    %245 = vector.broadcast %cst_18 : f32 to vector<2x128xf32>
    %246 = arith.select %163, %244, %245 : vector<2x128xi1>, vector<2x128xf32>
    %c8_i32_19 = arith.constant 8 : i32
    %247 = tpu.dynamic_rotate %246 by %c8_i32_19 dim 1 : vector<2x128xf32>, i32 -> vector<2x128xf32>
    %cst_20 = arith.constant 0.000000e+00 : f32
    %248 = vector.broadcast %cst_20 : f32 to vector<2x128xf32>
    %249 = arith.select %163, %247, %248 : vector<2x128xi1>, vector<2x128xf32>
    %c8_i32_21 = arith.constant 8 : i32
    %250 = tpu.dynamic_rotate %249 by %c8_i32_21 dim 1 : vector<2x128xf32>, i32 -> vector<2x128xf32>
    %cst_22 = arith.constant 0.000000e+00 : f32
    %251 = vector.broadcast %cst_22 : f32 to vector<2x128xf32>
    %252 = arith.select %163, %250, %251 : vector<2x128xi1>, vector<2x128xf32>
    %c8_i32_23 = arith.constant 8 : i32
    %253 = tpu.dynamic_rotate %252 by %c8_i32_23 dim 1 : vector<2x128xf32>, i32 -> vector<2x128xf32>
    %cst_24 = arith.constant 0.000000e+00 : f32
    %254 = vector.broadcast %cst_24 : f32 to vector<2x128xf32>
    %255 = arith.select %163, %253, %254 : vector<2x128xi1>, vector<2x128xf32>
    %c8_i32_25 = arith.constant 8 : i32
    %256 = tpu.dynamic_rotate %255 by %c8_i32_25 dim 1 : vector<2x128xf32>, i32 -> vector<2x128xf32>
    %cst_26 = arith.constant 0.000000e+00 : f32
    %257 = vector.broadcast %cst_26 : f32 to vector<2x128xf32>
    %258 = arith.select %163, %256, %257 : vector<2x128xi1>, vector<2x128xf32>
    %c8_i32_27 = arith.constant 8 : i32
    %259 = tpu.dynamic_rotate %258 by %c8_i32_27 dim 1 : vector<2x128xf32>, i32 -> vector<2x128xf32>
    %cst_28 = arith.constant 0.000000e+00 : f32
    %260 = vector.broadcast %cst_28 : f32 to vector<2x128xf32>
    %261 = arith.select %163, %259, %260 : vector<2x128xi1>, vector<2x128xf32>
    %c8_i32_29 = arith.constant 8 : i32
    %262 = tpu.dynamic_rotate %261 by %c8_i32_29 dim 1 : vector<2x128xf32>, i32 -> vector<2x128xf32>
    %cst_30 = arith.constant 0.000000e+00 : f32
    %263 = vector.broadcast %cst_30 : f32 to vector<2x128xf32>
    %264 = arith.select %163, %262, %263 : vector<2x128xi1>, vector<2x128xf32>
    %c8_i32_31 = arith.constant 8 : i32
    %265 = tpu.dynamic_rotate %264 by %c8_i32_31 dim 1 : vector<2x128xf32>, i32 -> vector<2x128xf32>
    %cst_32 = arith.constant 0.000000e+00 : f32
    %266 = vector.broadcast %cst_32 : f32 to vector<2x128xf32>
    %267 = arith.select %163, %265, %266 : vector<2x128xi1>, vector<2x128xf32>
    %268 = vector.broadcast %20 : f32 to vector<2x128xf32>
    %269 = arith.mulf %267, %268 : vector<2x128xf32>
    %270 = vector.broadcast %21 : f32 to vector<2x128xf32>
    %271 = arith.mulf %264, %270 : vector<2x128xf32>
    %272 = arith.addf %269, %271 : vector<2x128xf32>
    %273 = vector.broadcast %22 : f32 to vector<2x128xf32>
    %274 = arith.mulf %261, %273 : vector<2x128xf32>
    %275 = arith.addf %272, %274 : vector<2x128xf32>
    %276 = vector.broadcast %23 : f32 to vector<2x128xf32>
    %277 = arith.mulf %258, %276 : vector<2x128xf32>
    %278 = arith.addf %275, %277 : vector<2x128xf32>
    %279 = vector.broadcast %24 : f32 to vector<2x128xf32>
    %280 = arith.mulf %255, %279 : vector<2x128xf32>
    %281 = arith.addf %278, %280 : vector<2x128xf32>
    %282 = vector.broadcast %25 : f32 to vector<2x128xf32>
    %283 = arith.mulf %252, %282 : vector<2x128xf32>
    %284 = arith.addf %281, %283 : vector<2x128xf32>
    %285 = vector.broadcast %26 : f32 to vector<2x128xf32>
    %286 = arith.mulf %249, %285 : vector<2x128xf32>
    %287 = arith.addf %284, %286 : vector<2x128xf32>
    %288 = vector.broadcast %27 : f32 to vector<2x128xf32>
    %289 = arith.mulf %246, %288 : vector<2x128xf32>
    %290 = arith.addf %287, %289 : vector<2x128xf32>
    %291 = vector.broadcast %28 : f32 to vector<2x128xf32>
    %292 = arith.mulf %154, %291 : vector<2x128xf32>
    %293 = arith.addf %290, %292 : vector<2x128xf32>
    %294 = vector.broadcast %38 : f32 to vector<2x128xf32>
    %295 = arith.addf %293, %294 : vector<2x128xf32>
    %296 = vector.broadcast %29 : f32 to vector<2x128xf32>
    %297 = arith.mulf %267, %296 : vector<2x128xf32>
    %298 = vector.broadcast %30 : f32 to vector<2x128xf32>
    %299 = arith.mulf %264, %298 : vector<2x128xf32>
    %300 = arith.addf %297, %299 : vector<2x128xf32>
    %301 = vector.broadcast %31 : f32 to vector<2x128xf32>
    %302 = arith.mulf %261, %301 : vector<2x128xf32>
    %303 = arith.addf %300, %302 : vector<2x128xf32>
    %304 = vector.broadcast %32 : f32 to vector<2x128xf32>
    %305 = arith.mulf %258, %304 : vector<2x128xf32>
    %306 = arith.addf %303, %305 : vector<2x128xf32>
    %307 = vector.broadcast %33 : f32 to vector<2x128xf32>
    %308 = arith.mulf %255, %307 : vector<2x128xf32>
    %309 = arith.addf %306, %308 : vector<2x128xf32>
    %310 = vector.broadcast %34 : f32 to vector<2x128xf32>
    %311 = arith.mulf %252, %310 : vector<2x128xf32>
    %312 = arith.addf %309, %311 : vector<2x128xf32>
    %313 = vector.broadcast %35 : f32 to vector<2x128xf32>
    %314 = arith.mulf %249, %313 : vector<2x128xf32>
    %315 = arith.addf %312, %314 : vector<2x128xf32>
    %316 = vector.broadcast %36 : f32 to vector<2x128xf32>
    %317 = arith.mulf %246, %316 : vector<2x128xf32>
    %318 = arith.addf %315, %317 : vector<2x128xf32>
    %319 = vector.broadcast %37 : f32 to vector<2x128xf32>
    %320 = arith.mulf %154, %319 : vector<2x128xf32>
    %321 = arith.addf %318, %320 : vector<2x128xf32>
    %322 = vector.broadcast %39 : f32 to vector<2x128xf32>
    %323 = arith.addf %321, %322 : vector<2x128xf32>
    %324 = math.tanh %215 : vector<2x128xf32>
    %325 = math.tanh %243 : vector<2x128xf32>
    %c2_i32_33 = arith.constant 2 : i32
    %326 = tpu.dynamic_rotate %324 by %c2_i32_33 dim 1 : vector<2x128xf32>, i32 -> vector<2x128xf32>
    %cst_34 = arith.constant 0.000000e+00 : f32
    %327 = vector.broadcast %cst_34 : f32 to vector<2x128xf32>
    %328 = arith.select %159, %326, %327 : vector<2x128xi1>, vector<2x128xf32>
    %c2_i32_35 = arith.constant 2 : i32
    %329 = tpu.dynamic_rotate %328 by %c2_i32_35 dim 1 : vector<2x128xf32>, i32 -> vector<2x128xf32>
    %cst_36 = arith.constant 0.000000e+00 : f32
    %330 = vector.broadcast %cst_36 : f32 to vector<2x128xf32>
    %331 = arith.select %159, %329, %330 : vector<2x128xi1>, vector<2x128xf32>
    %c2_i32_37 = arith.constant 2 : i32
    %332 = tpu.dynamic_rotate %331 by %c2_i32_37 dim 1 : vector<2x128xf32>, i32 -> vector<2x128xf32>
    %cst_38 = arith.constant 0.000000e+00 : f32
    %333 = vector.broadcast %cst_38 : f32 to vector<2x128xf32>
    %334 = arith.select %159, %332, %333 : vector<2x128xi1>, vector<2x128xf32>
    %c2_i32_39 = arith.constant 2 : i32
    %335 = tpu.dynamic_rotate %334 by %c2_i32_39 dim 1 : vector<2x128xf32>, i32 -> vector<2x128xf32>
    %cst_40 = arith.constant 0.000000e+00 : f32
    %336 = vector.broadcast %cst_40 : f32 to vector<2x128xf32>
    %337 = arith.select %159, %335, %336 : vector<2x128xi1>, vector<2x128xf32>
    %c2_i32_41 = arith.constant 2 : i32
    %338 = tpu.dynamic_rotate %337 by %c2_i32_41 dim 1 : vector<2x128xf32>, i32 -> vector<2x128xf32>
    %cst_42 = arith.constant 0.000000e+00 : f32
    %339 = vector.broadcast %cst_42 : f32 to vector<2x128xf32>
    %340 = arith.select %159, %338, %339 : vector<2x128xi1>, vector<2x128xf32>
    %c2_i32_43 = arith.constant 2 : i32
    %341 = tpu.dynamic_rotate %340 by %c2_i32_43 dim 1 : vector<2x128xf32>, i32 -> vector<2x128xf32>
    %cst_44 = arith.constant 0.000000e+00 : f32
    %342 = vector.broadcast %cst_44 : f32 to vector<2x128xf32>
    %343 = arith.select %159, %341, %342 : vector<2x128xi1>, vector<2x128xf32>
    %c2_i32_45 = arith.constant 2 : i32
    %344 = tpu.dynamic_rotate %343 by %c2_i32_45 dim 1 : vector<2x128xf32>, i32 -> vector<2x128xf32>
    %cst_46 = arith.constant 0.000000e+00 : f32
    %345 = vector.broadcast %cst_46 : f32 to vector<2x128xf32>
    %346 = arith.select %159, %344, %345 : vector<2x128xi1>, vector<2x128xf32>
    %c2_i32_47 = arith.constant 2 : i32
    %347 = tpu.dynamic_rotate %346 by %c2_i32_47 dim 1 : vector<2x128xf32>, i32 -> vector<2x128xf32>
    %cst_48 = arith.constant 0.000000e+00 : f32
    %348 = vector.broadcast %cst_48 : f32 to vector<2x128xf32>
    %349 = arith.select %159, %347, %348 : vector<2x128xi1>, vector<2x128xf32>
    %c2_i32_49 = arith.constant 2 : i32
    %350 = tpu.dynamic_rotate %325 by %c2_i32_49 dim 1 : vector<2x128xf32>, i32 -> vector<2x128xf32>
    %cst_50 = arith.constant 0.000000e+00 : f32
    %351 = vector.broadcast %cst_50 : f32 to vector<2x128xf32>
    %352 = arith.select %159, %350, %351 : vector<2x128xi1>, vector<2x128xf32>
    %c2_i32_51 = arith.constant 2 : i32
    %353 = tpu.dynamic_rotate %352 by %c2_i32_51 dim 1 : vector<2x128xf32>, i32 -> vector<2x128xf32>
    %cst_52 = arith.constant 0.000000e+00 : f32
    %354 = vector.broadcast %cst_52 : f32 to vector<2x128xf32>
    %355 = arith.select %159, %353, %354 : vector<2x128xi1>, vector<2x128xf32>
    %c2_i32_53 = arith.constant 2 : i32
    %356 = tpu.dynamic_rotate %355 by %c2_i32_53 dim 1 : vector<2x128xf32>, i32 -> vector<2x128xf32>
    %cst_54 = arith.constant 0.000000e+00 : f32
    %357 = vector.broadcast %cst_54 : f32 to vector<2x128xf32>
    %358 = arith.select %159, %356, %357 : vector<2x128xi1>, vector<2x128xf32>
    %c2_i32_55 = arith.constant 2 : i32
    %359 = tpu.dynamic_rotate %358 by %c2_i32_55 dim 1 : vector<2x128xf32>, i32 -> vector<2x128xf32>
    %cst_56 = arith.constant 0.000000e+00 : f32
    %360 = vector.broadcast %cst_56 : f32 to vector<2x128xf32>
    %361 = arith.select %159, %359, %360 : vector<2x128xi1>, vector<2x128xf32>
    %c2_i32_57 = arith.constant 2 : i32
    %362 = tpu.dynamic_rotate %361 by %c2_i32_57 dim 1 : vector<2x128xf32>, i32 -> vector<2x128xf32>
    %cst_58 = arith.constant 0.000000e+00 : f32
    %363 = vector.broadcast %cst_58 : f32 to vector<2x128xf32>
    %364 = arith.select %159, %362, %363 : vector<2x128xi1>, vector<2x128xf32>
    %c2_i32_59 = arith.constant 2 : i32
    %365 = tpu.dynamic_rotate %364 by %c2_i32_59 dim 1 : vector<2x128xf32>, i32 -> vector<2x128xf32>
    %cst_60 = arith.constant 0.000000e+00 : f32
    %366 = vector.broadcast %cst_60 : f32 to vector<2x128xf32>
    %367 = arith.select %159, %365, %366 : vector<2x128xi1>, vector<2x128xf32>
    %c2_i32_61 = arith.constant 2 : i32
    %368 = tpu.dynamic_rotate %367 by %c2_i32_61 dim 1 : vector<2x128xf32>, i32 -> vector<2x128xf32>
    %cst_62 = arith.constant 0.000000e+00 : f32
    %369 = vector.broadcast %cst_62 : f32 to vector<2x128xf32>
    %370 = arith.select %159, %368, %369 : vector<2x128xi1>, vector<2x128xf32>
    %c2_i32_63 = arith.constant 2 : i32
    %371 = tpu.dynamic_rotate %370 by %c2_i32_63 dim 1 : vector<2x128xf32>, i32 -> vector<2x128xf32>
    %cst_64 = arith.constant 0.000000e+00 : f32
    %372 = vector.broadcast %cst_64 : f32 to vector<2x128xf32>
    %373 = arith.select %159, %371, %372 : vector<2x128xi1>, vector<2x128xf32>
    %374 = vector.broadcast %40 : f32 to vector<2x128xf32>
    %375 = arith.mulf %349, %374 : vector<2x128xf32>
    %376 = vector.broadcast %41 : f32 to vector<2x128xf32>
    %377 = arith.mulf %346, %376 : vector<2x128xf32>
    %378 = arith.addf %375, %377 : vector<2x128xf32>
    %379 = vector.broadcast %42 : f32 to vector<2x128xf32>
    %380 = arith.mulf %343, %379 : vector<2x128xf32>
    %381 = arith.addf %378, %380 : vector<2x128xf32>
    %382 = vector.broadcast %43 : f32 to vector<2x128xf32>
    %383 = arith.mulf %340, %382 : vector<2x128xf32>
    %384 = arith.addf %381, %383 : vector<2x128xf32>
    %385 = vector.broadcast %44 : f32 to vector<2x128xf32>
    %386 = arith.mulf %337, %385 : vector<2x128xf32>
    %387 = arith.addf %384, %386 : vector<2x128xf32>
    %388 = vector.broadcast %45 : f32 to vector<2x128xf32>
    %389 = arith.mulf %334, %388 : vector<2x128xf32>
    %390 = arith.addf %387, %389 : vector<2x128xf32>
    %391 = vector.broadcast %46 : f32 to vector<2x128xf32>
    %392 = arith.mulf %331, %391 : vector<2x128xf32>
    %393 = arith.addf %390, %392 : vector<2x128xf32>
    %394 = vector.broadcast %47 : f32 to vector<2x128xf32>
    %395 = arith.mulf %328, %394 : vector<2x128xf32>
    %396 = arith.addf %393, %395 : vector<2x128xf32>
    %397 = vector.broadcast %48 : f32 to vector<2x128xf32>
    %398 = arith.mulf %324, %397 : vector<2x128xf32>
    %399 = arith.addf %396, %398 : vector<2x128xf32>
    %400 = vector.broadcast %49 : f32 to vector<2x128xf32>
    %401 = arith.mulf %373, %400 : vector<2x128xf32>
    %402 = arith.addf %399, %401 : vector<2x128xf32>
    %403 = vector.broadcast %50 : f32 to vector<2x128xf32>
    %404 = arith.mulf %370, %403 : vector<2x128xf32>
    %405 = arith.addf %402, %404 : vector<2x128xf32>
    %406 = vector.broadcast %51 : f32 to vector<2x128xf32>
    %407 = arith.mulf %367, %406 : vector<2x128xf32>
    %408 = arith.addf %405, %407 : vector<2x128xf32>
    %409 = vector.broadcast %52 : f32 to vector<2x128xf32>
    %410 = arith.mulf %364, %409 : vector<2x128xf32>
    %411 = arith.addf %408, %410 : vector<2x128xf32>
    %412 = vector.broadcast %53 : f32 to vector<2x128xf32>
    %413 = arith.mulf %361, %412 : vector<2x128xf32>
    %414 = arith.addf %411, %413 : vector<2x128xf32>
    %415 = vector.broadcast %54 : f32 to vector<2x128xf32>
    %416 = arith.mulf %358, %415 : vector<2x128xf32>
    %417 = arith.addf %414, %416 : vector<2x128xf32>
    %418 = vector.broadcast %55 : f32 to vector<2x128xf32>
    %419 = arith.mulf %355, %418 : vector<2x128xf32>
    %420 = arith.addf %417, %419 : vector<2x128xf32>
    %421 = vector.broadcast %56 : f32 to vector<2x128xf32>
    %422 = arith.mulf %352, %421 : vector<2x128xf32>
    %423 = arith.addf %420, %422 : vector<2x128xf32>
    %424 = vector.broadcast %57 : f32 to vector<2x128xf32>
    %425 = arith.mulf %325, %424 : vector<2x128xf32>
    %426 = arith.addf %423, %425 : vector<2x128xf32>
    %427 = vector.broadcast %76 : f32 to vector<2x128xf32>
    %428 = arith.addf %426, %427 : vector<2x128xf32>
    %429 = vector.broadcast %58 : f32 to vector<2x128xf32>
    %430 = arith.mulf %349, %429 : vector<2x128xf32>
    %431 = vector.broadcast %59 : f32 to vector<2x128xf32>
    %432 = arith.mulf %346, %431 : vector<2x128xf32>
    %433 = arith.addf %430, %432 : vector<2x128xf32>
    %434 = vector.broadcast %60 : f32 to vector<2x128xf32>
    %435 = arith.mulf %343, %434 : vector<2x128xf32>
    %436 = arith.addf %433, %435 : vector<2x128xf32>
    %437 = vector.broadcast %61 : f32 to vector<2x128xf32>
    %438 = arith.mulf %340, %437 : vector<2x128xf32>
    %439 = arith.addf %436, %438 : vector<2x128xf32>
    %440 = vector.broadcast %62 : f32 to vector<2x128xf32>
    %441 = arith.mulf %337, %440 : vector<2x128xf32>
    %442 = arith.addf %439, %441 : vector<2x128xf32>
    %443 = vector.broadcast %63 : f32 to vector<2x128xf32>
    %444 = arith.mulf %334, %443 : vector<2x128xf32>
    %445 = arith.addf %442, %444 : vector<2x128xf32>
    %446 = vector.broadcast %64 : f32 to vector<2x128xf32>
    %447 = arith.mulf %331, %446 : vector<2x128xf32>
    %448 = arith.addf %445, %447 : vector<2x128xf32>
    %449 = vector.broadcast %65 : f32 to vector<2x128xf32>
    %450 = arith.mulf %328, %449 : vector<2x128xf32>
    %451 = arith.addf %448, %450 : vector<2x128xf32>
    %452 = vector.broadcast %66 : f32 to vector<2x128xf32>
    %453 = arith.mulf %324, %452 : vector<2x128xf32>
    %454 = arith.addf %451, %453 : vector<2x128xf32>
    %455 = vector.broadcast %67 : f32 to vector<2x128xf32>
    %456 = arith.mulf %373, %455 : vector<2x128xf32>
    %457 = arith.addf %454, %456 : vector<2x128xf32>
    %458 = vector.broadcast %68 : f32 to vector<2x128xf32>
    %459 = arith.mulf %370, %458 : vector<2x128xf32>
    %460 = arith.addf %457, %459 : vector<2x128xf32>
    %461 = vector.broadcast %69 : f32 to vector<2x128xf32>
    %462 = arith.mulf %367, %461 : vector<2x128xf32>
    %463 = arith.addf %460, %462 : vector<2x128xf32>
    %464 = vector.broadcast %70 : f32 to vector<2x128xf32>
    %465 = arith.mulf %364, %464 : vector<2x128xf32>
    %466 = arith.addf %463, %465 : vector<2x128xf32>
    %467 = vector.broadcast %71 : f32 to vector<2x128xf32>
    %468 = arith.mulf %361, %467 : vector<2x128xf32>
    %469 = arith.addf %466, %468 : vector<2x128xf32>
    %470 = vector.broadcast %72 : f32 to vector<2x128xf32>
    %471 = arith.mulf %358, %470 : vector<2x128xf32>
    %472 = arith.addf %469, %471 : vector<2x128xf32>
    %473 = vector.broadcast %73 : f32 to vector<2x128xf32>
    %474 = arith.mulf %355, %473 : vector<2x128xf32>
    %475 = arith.addf %472, %474 : vector<2x128xf32>
    %476 = vector.broadcast %74 : f32 to vector<2x128xf32>
    %477 = arith.mulf %352, %476 : vector<2x128xf32>
    %478 = arith.addf %475, %477 : vector<2x128xf32>
    %479 = vector.broadcast %75 : f32 to vector<2x128xf32>
    %480 = arith.mulf %325, %479 : vector<2x128xf32>
    %481 = arith.addf %478, %480 : vector<2x128xf32>
    %482 = vector.broadcast %77 : f32 to vector<2x128xf32>
    %483 = arith.addf %481, %482 : vector<2x128xf32>
    %484 = math.tanh %428 : vector<2x128xf32>
    %485 = math.tanh %483 : vector<2x128xf32>
    %c4_i32_65 = arith.constant 4 : i32
    %486 = tpu.dynamic_rotate %484 by %c4_i32_65 dim 1 : vector<2x128xf32>, i32 -> vector<2x128xf32>
    %cst_66 = arith.constant 0.000000e+00 : f32
    %487 = vector.broadcast %cst_66 : f32 to vector<2x128xf32>
    %488 = arith.select %161, %486, %487 : vector<2x128xi1>, vector<2x128xf32>
    %c4_i32_67 = arith.constant 4 : i32
    %489 = tpu.dynamic_rotate %488 by %c4_i32_67 dim 1 : vector<2x128xf32>, i32 -> vector<2x128xf32>
    %cst_68 = arith.constant 0.000000e+00 : f32
    %490 = vector.broadcast %cst_68 : f32 to vector<2x128xf32>
    %491 = arith.select %161, %489, %490 : vector<2x128xi1>, vector<2x128xf32>
    %c4_i32_69 = arith.constant 4 : i32
    %492 = tpu.dynamic_rotate %491 by %c4_i32_69 dim 1 : vector<2x128xf32>, i32 -> vector<2x128xf32>
    %cst_70 = arith.constant 0.000000e+00 : f32
    %493 = vector.broadcast %cst_70 : f32 to vector<2x128xf32>
    %494 = arith.select %161, %492, %493 : vector<2x128xi1>, vector<2x128xf32>
    %c4_i32_71 = arith.constant 4 : i32
    %495 = tpu.dynamic_rotate %494 by %c4_i32_71 dim 1 : vector<2x128xf32>, i32 -> vector<2x128xf32>
    %cst_72 = arith.constant 0.000000e+00 : f32
    %496 = vector.broadcast %cst_72 : f32 to vector<2x128xf32>
    %497 = arith.select %161, %495, %496 : vector<2x128xi1>, vector<2x128xf32>
    %c4_i32_73 = arith.constant 4 : i32
    %498 = tpu.dynamic_rotate %497 by %c4_i32_73 dim 1 : vector<2x128xf32>, i32 -> vector<2x128xf32>
    %cst_74 = arith.constant 0.000000e+00 : f32
    %499 = vector.broadcast %cst_74 : f32 to vector<2x128xf32>
    %500 = arith.select %161, %498, %499 : vector<2x128xi1>, vector<2x128xf32>
    %c4_i32_75 = arith.constant 4 : i32
    %501 = tpu.dynamic_rotate %500 by %c4_i32_75 dim 1 : vector<2x128xf32>, i32 -> vector<2x128xf32>
    %cst_76 = arith.constant 0.000000e+00 : f32
    %502 = vector.broadcast %cst_76 : f32 to vector<2x128xf32>
    %503 = arith.select %161, %501, %502 : vector<2x128xi1>, vector<2x128xf32>
    %c4_i32_77 = arith.constant 4 : i32
    %504 = tpu.dynamic_rotate %503 by %c4_i32_77 dim 1 : vector<2x128xf32>, i32 -> vector<2x128xf32>
    %cst_78 = arith.constant 0.000000e+00 : f32
    %505 = vector.broadcast %cst_78 : f32 to vector<2x128xf32>
    %506 = arith.select %161, %504, %505 : vector<2x128xi1>, vector<2x128xf32>
    %c4_i32_79 = arith.constant 4 : i32
    %507 = tpu.dynamic_rotate %506 by %c4_i32_79 dim 1 : vector<2x128xf32>, i32 -> vector<2x128xf32>
    %cst_80 = arith.constant 0.000000e+00 : f32
    %508 = vector.broadcast %cst_80 : f32 to vector<2x128xf32>
    %509 = arith.select %161, %507, %508 : vector<2x128xi1>, vector<2x128xf32>
    %c4_i32_81 = arith.constant 4 : i32
    %510 = tpu.dynamic_rotate %485 by %c4_i32_81 dim 1 : vector<2x128xf32>, i32 -> vector<2x128xf32>
    %cst_82 = arith.constant 0.000000e+00 : f32
    %511 = vector.broadcast %cst_82 : f32 to vector<2x128xf32>
    %512 = arith.select %161, %510, %511 : vector<2x128xi1>, vector<2x128xf32>
    %c4_i32_83 = arith.constant 4 : i32
    %513 = tpu.dynamic_rotate %512 by %c4_i32_83 dim 1 : vector<2x128xf32>, i32 -> vector<2x128xf32>
    %cst_84 = arith.constant 0.000000e+00 : f32
    %514 = vector.broadcast %cst_84 : f32 to vector<2x128xf32>
    %515 = arith.select %161, %513, %514 : vector<2x128xi1>, vector<2x128xf32>
    %c4_i32_85 = arith.constant 4 : i32
    %516 = tpu.dynamic_rotate %515 by %c4_i32_85 dim 1 : vector<2x128xf32>, i32 -> vector<2x128xf32>
    %cst_86 = arith.constant 0.000000e+00 : f32
    %517 = vector.broadcast %cst_86 : f32 to vector<2x128xf32>
    %518 = arith.select %161, %516, %517 : vector<2x128xi1>, vector<2x128xf32>
    %c4_i32_87 = arith.constant 4 : i32
    %519 = tpu.dynamic_rotate %518 by %c4_i32_87 dim 1 : vector<2x128xf32>, i32 -> vector<2x128xf32>
    %cst_88 = arith.constant 0.000000e+00 : f32
    %520 = vector.broadcast %cst_88 : f32 to vector<2x128xf32>
    %521 = arith.select %161, %519, %520 : vector<2x128xi1>, vector<2x128xf32>
    %c4_i32_89 = arith.constant 4 : i32
    %522 = tpu.dynamic_rotate %521 by %c4_i32_89 dim 1 : vector<2x128xf32>, i32 -> vector<2x128xf32>
    %cst_90 = arith.constant 0.000000e+00 : f32
    %523 = vector.broadcast %cst_90 : f32 to vector<2x128xf32>
    %524 = arith.select %161, %522, %523 : vector<2x128xi1>, vector<2x128xf32>
    %c4_i32_91 = arith.constant 4 : i32
    %525 = tpu.dynamic_rotate %524 by %c4_i32_91 dim 1 : vector<2x128xf32>, i32 -> vector<2x128xf32>
    %cst_92 = arith.constant 0.000000e+00 : f32
    %526 = vector.broadcast %cst_92 : f32 to vector<2x128xf32>
    %527 = arith.select %161, %525, %526 : vector<2x128xi1>, vector<2x128xf32>
    %c4_i32_93 = arith.constant 4 : i32
    %528 = tpu.dynamic_rotate %527 by %c4_i32_93 dim 1 : vector<2x128xf32>, i32 -> vector<2x128xf32>
    %cst_94 = arith.constant 0.000000e+00 : f32
    %529 = vector.broadcast %cst_94 : f32 to vector<2x128xf32>
    %530 = arith.select %161, %528, %529 : vector<2x128xi1>, vector<2x128xf32>
    %c4_i32_95 = arith.constant 4 : i32
    %531 = tpu.dynamic_rotate %530 by %c4_i32_95 dim 1 : vector<2x128xf32>, i32 -> vector<2x128xf32>
    %cst_96 = arith.constant 0.000000e+00 : f32
    %532 = vector.broadcast %cst_96 : f32 to vector<2x128xf32>
    %533 = arith.select %161, %531, %532 : vector<2x128xi1>, vector<2x128xf32>
    %534 = vector.broadcast %78 : f32 to vector<2x128xf32>
    %535 = arith.mulf %509, %534 : vector<2x128xf32>
    %536 = vector.broadcast %79 : f32 to vector<2x128xf32>
    %537 = arith.mulf %506, %536 : vector<2x128xf32>
    %538 = arith.addf %535, %537 : vector<2x128xf32>
    %539 = vector.broadcast %80 : f32 to vector<2x128xf32>
    %540 = arith.mulf %503, %539 : vector<2x128xf32>
    %541 = arith.addf %538, %540 : vector<2x128xf32>
    %542 = vector.broadcast %81 : f32 to vector<2x128xf32>
    %543 = arith.mulf %500, %542 : vector<2x128xf32>
    %544 = arith.addf %541, %543 : vector<2x128xf32>
    %545 = vector.broadcast %82 : f32 to vector<2x128xf32>
    %546 = arith.mulf %497, %545 : vector<2x128xf32>
    %547 = arith.addf %544, %546 : vector<2x128xf32>
    %548 = vector.broadcast %83 : f32 to vector<2x128xf32>
    %549 = arith.mulf %494, %548 : vector<2x128xf32>
    %550 = arith.addf %547, %549 : vector<2x128xf32>
    %551 = vector.broadcast %84 : f32 to vector<2x128xf32>
    %552 = arith.mulf %491, %551 : vector<2x128xf32>
    %553 = arith.addf %550, %552 : vector<2x128xf32>
    %554 = vector.broadcast %85 : f32 to vector<2x128xf32>
    %555 = arith.mulf %488, %554 : vector<2x128xf32>
    %556 = arith.addf %553, %555 : vector<2x128xf32>
    %557 = vector.broadcast %86 : f32 to vector<2x128xf32>
    %558 = arith.mulf %484, %557 : vector<2x128xf32>
    %559 = arith.addf %556, %558 : vector<2x128xf32>
    %560 = vector.broadcast %87 : f32 to vector<2x128xf32>
    %561 = arith.mulf %533, %560 : vector<2x128xf32>
    %562 = arith.addf %559, %561 : vector<2x128xf32>
    %563 = vector.broadcast %88 : f32 to vector<2x128xf32>
    %564 = arith.mulf %530, %563 : vector<2x128xf32>
    %565 = arith.addf %562, %564 : vector<2x128xf32>
    %566 = vector.broadcast %89 : f32 to vector<2x128xf32>
    %567 = arith.mulf %527, %566 : vector<2x128xf32>
    %568 = arith.addf %565, %567 : vector<2x128xf32>
    %569 = vector.broadcast %90 : f32 to vector<2x128xf32>
    %570 = arith.mulf %524, %569 : vector<2x128xf32>
    %571 = arith.addf %568, %570 : vector<2x128xf32>
    %572 = vector.broadcast %91 : f32 to vector<2x128xf32>
    %573 = arith.mulf %521, %572 : vector<2x128xf32>
    %574 = arith.addf %571, %573 : vector<2x128xf32>
    %575 = vector.broadcast %92 : f32 to vector<2x128xf32>
    %576 = arith.mulf %518, %575 : vector<2x128xf32>
    %577 = arith.addf %574, %576 : vector<2x128xf32>
    %578 = vector.broadcast %93 : f32 to vector<2x128xf32>
    %579 = arith.mulf %515, %578 : vector<2x128xf32>
    %580 = arith.addf %577, %579 : vector<2x128xf32>
    %581 = vector.broadcast %94 : f32 to vector<2x128xf32>
    %582 = arith.mulf %512, %581 : vector<2x128xf32>
    %583 = arith.addf %580, %582 : vector<2x128xf32>
    %584 = vector.broadcast %95 : f32 to vector<2x128xf32>
    %585 = arith.mulf %485, %584 : vector<2x128xf32>
    %586 = arith.addf %583, %585 : vector<2x128xf32>
    %587 = vector.broadcast %114 : f32 to vector<2x128xf32>
    %588 = arith.addf %586, %587 : vector<2x128xf32>
    %589 = vector.broadcast %96 : f32 to vector<2x128xf32>
    %590 = arith.mulf %509, %589 : vector<2x128xf32>
    %591 = vector.broadcast %97 : f32 to vector<2x128xf32>
    %592 = arith.mulf %506, %591 : vector<2x128xf32>
    %593 = arith.addf %590, %592 : vector<2x128xf32>
    %594 = vector.broadcast %98 : f32 to vector<2x128xf32>
    %595 = arith.mulf %503, %594 : vector<2x128xf32>
    %596 = arith.addf %593, %595 : vector<2x128xf32>
    %597 = vector.broadcast %99 : f32 to vector<2x128xf32>
    %598 = arith.mulf %500, %597 : vector<2x128xf32>
    %599 = arith.addf %596, %598 : vector<2x128xf32>
    %600 = vector.broadcast %100 : f32 to vector<2x128xf32>
    %601 = arith.mulf %497, %600 : vector<2x128xf32>
    %602 = arith.addf %599, %601 : vector<2x128xf32>
    %603 = vector.broadcast %101 : f32 to vector<2x128xf32>
    %604 = arith.mulf %494, %603 : vector<2x128xf32>
    %605 = arith.addf %602, %604 : vector<2x128xf32>
    %606 = vector.broadcast %102 : f32 to vector<2x128xf32>
    %607 = arith.mulf %491, %606 : vector<2x128xf32>
    %608 = arith.addf %605, %607 : vector<2x128xf32>
    %609 = vector.broadcast %103 : f32 to vector<2x128xf32>
    %610 = arith.mulf %488, %609 : vector<2x128xf32>
    %611 = arith.addf %608, %610 : vector<2x128xf32>
    %612 = vector.broadcast %104 : f32 to vector<2x128xf32>
    %613 = arith.mulf %484, %612 : vector<2x128xf32>
    %614 = arith.addf %611, %613 : vector<2x128xf32>
    %615 = vector.broadcast %105 : f32 to vector<2x128xf32>
    %616 = arith.mulf %533, %615 : vector<2x128xf32>
    %617 = arith.addf %614, %616 : vector<2x128xf32>
    %618 = vector.broadcast %106 : f32 to vector<2x128xf32>
    %619 = arith.mulf %530, %618 : vector<2x128xf32>
    %620 = arith.addf %617, %619 : vector<2x128xf32>
    %621 = vector.broadcast %107 : f32 to vector<2x128xf32>
    %622 = arith.mulf %527, %621 : vector<2x128xf32>
    %623 = arith.addf %620, %622 : vector<2x128xf32>
    %624 = vector.broadcast %108 : f32 to vector<2x128xf32>
    %625 = arith.mulf %524, %624 : vector<2x128xf32>
    %626 = arith.addf %623, %625 : vector<2x128xf32>
    %627 = vector.broadcast %109 : f32 to vector<2x128xf32>
    %628 = arith.mulf %521, %627 : vector<2x128xf32>
    %629 = arith.addf %626, %628 : vector<2x128xf32>
    %630 = vector.broadcast %110 : f32 to vector<2x128xf32>
    %631 = arith.mulf %518, %630 : vector<2x128xf32>
    %632 = arith.addf %629, %631 : vector<2x128xf32>
    %633 = vector.broadcast %111 : f32 to vector<2x128xf32>
    %634 = arith.mulf %515, %633 : vector<2x128xf32>
    %635 = arith.addf %632, %634 : vector<2x128xf32>
    %636 = vector.broadcast %112 : f32 to vector<2x128xf32>
    %637 = arith.mulf %512, %636 : vector<2x128xf32>
    %638 = arith.addf %635, %637 : vector<2x128xf32>
    %639 = vector.broadcast %113 : f32 to vector<2x128xf32>
    %640 = arith.mulf %485, %639 : vector<2x128xf32>
    %641 = arith.addf %638, %640 : vector<2x128xf32>
    %642 = vector.broadcast %115 : f32 to vector<2x128xf32>
    %643 = arith.addf %641, %642 : vector<2x128xf32>
    %644 = math.tanh %588 : vector<2x128xf32>
    %645 = math.tanh %643 : vector<2x128xf32>
    %c8_i32_97 = arith.constant 8 : i32
    %646 = tpu.dynamic_rotate %644 by %c8_i32_97 dim 1 : vector<2x128xf32>, i32 -> vector<2x128xf32>
    %cst_98 = arith.constant 0.000000e+00 : f32
    %647 = vector.broadcast %cst_98 : f32 to vector<2x128xf32>
    %648 = arith.select %163, %646, %647 : vector<2x128xi1>, vector<2x128xf32>
    %c8_i32_99 = arith.constant 8 : i32
    %649 = tpu.dynamic_rotate %648 by %c8_i32_99 dim 1 : vector<2x128xf32>, i32 -> vector<2x128xf32>
    %cst_100 = arith.constant 0.000000e+00 : f32
    %650 = vector.broadcast %cst_100 : f32 to vector<2x128xf32>
    %651 = arith.select %163, %649, %650 : vector<2x128xi1>, vector<2x128xf32>
    %c8_i32_101 = arith.constant 8 : i32
    %652 = tpu.dynamic_rotate %651 by %c8_i32_101 dim 1 : vector<2x128xf32>, i32 -> vector<2x128xf32>
    %cst_102 = arith.constant 0.000000e+00 : f32
    %653 = vector.broadcast %cst_102 : f32 to vector<2x128xf32>
    %654 = arith.select %163, %652, %653 : vector<2x128xi1>, vector<2x128xf32>
    %c8_i32_103 = arith.constant 8 : i32
    %655 = tpu.dynamic_rotate %654 by %c8_i32_103 dim 1 : vector<2x128xf32>, i32 -> vector<2x128xf32>
    %cst_104 = arith.constant 0.000000e+00 : f32
    %656 = vector.broadcast %cst_104 : f32 to vector<2x128xf32>
    %657 = arith.select %163, %655, %656 : vector<2x128xi1>, vector<2x128xf32>
    %c8_i32_105 = arith.constant 8 : i32
    %658 = tpu.dynamic_rotate %657 by %c8_i32_105 dim 1 : vector<2x128xf32>, i32 -> vector<2x128xf32>
    %cst_106 = arith.constant 0.000000e+00 : f32
    %659 = vector.broadcast %cst_106 : f32 to vector<2x128xf32>
    %660 = arith.select %163, %658, %659 : vector<2x128xi1>, vector<2x128xf32>
    %c8_i32_107 = arith.constant 8 : i32
    %661 = tpu.dynamic_rotate %660 by %c8_i32_107 dim 1 : vector<2x128xf32>, i32 -> vector<2x128xf32>
    %cst_108 = arith.constant 0.000000e+00 : f32
    %662 = vector.broadcast %cst_108 : f32 to vector<2x128xf32>
    %663 = arith.select %163, %661, %662 : vector<2x128xi1>, vector<2x128xf32>
    %c8_i32_109 = arith.constant 8 : i32
    %664 = tpu.dynamic_rotate %663 by %c8_i32_109 dim 1 : vector<2x128xf32>, i32 -> vector<2x128xf32>
    %cst_110 = arith.constant 0.000000e+00 : f32
    %665 = vector.broadcast %cst_110 : f32 to vector<2x128xf32>
    %666 = arith.select %163, %664, %665 : vector<2x128xi1>, vector<2x128xf32>
    %c8_i32_111 = arith.constant 8 : i32
    %667 = tpu.dynamic_rotate %666 by %c8_i32_111 dim 1 : vector<2x128xf32>, i32 -> vector<2x128xf32>
    %cst_112 = arith.constant 0.000000e+00 : f32
    %668 = vector.broadcast %cst_112 : f32 to vector<2x128xf32>
    %669 = arith.select %163, %667, %668 : vector<2x128xi1>, vector<2x128xf32>
    %c8_i32_113 = arith.constant 8 : i32
    %670 = tpu.dynamic_rotate %645 by %c8_i32_113 dim 1 : vector<2x128xf32>, i32 -> vector<2x128xf32>
    %cst_114 = arith.constant 0.000000e+00 : f32
    %671 = vector.broadcast %cst_114 : f32 to vector<2x128xf32>
    %672 = arith.select %163, %670, %671 : vector<2x128xi1>, vector<2x128xf32>
    %c8_i32_115 = arith.constant 8 : i32
    %673 = tpu.dynamic_rotate %672 by %c8_i32_115 dim 1 : vector<2x128xf32>, i32 -> vector<2x128xf32>
    %cst_116 = arith.constant 0.000000e+00 : f32
    %674 = vector.broadcast %cst_116 : f32 to vector<2x128xf32>
    %675 = arith.select %163, %673, %674 : vector<2x128xi1>, vector<2x128xf32>
    %c8_i32_117 = arith.constant 8 : i32
    %676 = tpu.dynamic_rotate %675 by %c8_i32_117 dim 1 : vector<2x128xf32>, i32 -> vector<2x128xf32>
    %cst_118 = arith.constant 0.000000e+00 : f32
    %677 = vector.broadcast %cst_118 : f32 to vector<2x128xf32>
    %678 = arith.select %163, %676, %677 : vector<2x128xi1>, vector<2x128xf32>
    %c8_i32_119 = arith.constant 8 : i32
    %679 = tpu.dynamic_rotate %678 by %c8_i32_119 dim 1 : vector<2x128xf32>, i32 -> vector<2x128xf32>
    %cst_120 = arith.constant 0.000000e+00 : f32
    %680 = vector.broadcast %cst_120 : f32 to vector<2x128xf32>
    %681 = arith.select %163, %679, %680 : vector<2x128xi1>, vector<2x128xf32>
    %c8_i32_121 = arith.constant 8 : i32
    %682 = tpu.dynamic_rotate %681 by %c8_i32_121 dim 1 : vector<2x128xf32>, i32 -> vector<2x128xf32>
    %cst_122 = arith.constant 0.000000e+00 : f32
    %683 = vector.broadcast %cst_122 : f32 to vector<2x128xf32>
    %684 = arith.select %163, %682, %683 : vector<2x128xi1>, vector<2x128xf32>
    %c8_i32_123 = arith.constant 8 : i32
    %685 = tpu.dynamic_rotate %684 by %c8_i32_123 dim 1 : vector<2x128xf32>, i32 -> vector<2x128xf32>
    %cst_124 = arith.constant 0.000000e+00 : f32
    %686 = vector.broadcast %cst_124 : f32 to vector<2x128xf32>
    %687 = arith.select %163, %685, %686 : vector<2x128xi1>, vector<2x128xf32>
    %c8_i32_125 = arith.constant 8 : i32
    %688 = tpu.dynamic_rotate %687 by %c8_i32_125 dim 1 : vector<2x128xf32>, i32 -> vector<2x128xf32>
    %cst_126 = arith.constant 0.000000e+00 : f32
    %689 = vector.broadcast %cst_126 : f32 to vector<2x128xf32>
    %690 = arith.select %163, %688, %689 : vector<2x128xi1>, vector<2x128xf32>
    %c8_i32_127 = arith.constant 8 : i32
    %691 = tpu.dynamic_rotate %690 by %c8_i32_127 dim 1 : vector<2x128xf32>, i32 -> vector<2x128xf32>
    %cst_128 = arith.constant 0.000000e+00 : f32
    %692 = vector.broadcast %cst_128 : f32 to vector<2x128xf32>
    %693 = arith.select %163, %691, %692 : vector<2x128xi1>, vector<2x128xf32>
    %694 = vector.broadcast %116 : f32 to vector<2x128xf32>
    %695 = arith.mulf %669, %694 : vector<2x128xf32>
    %696 = vector.broadcast %117 : f32 to vector<2x128xf32>
    %697 = arith.mulf %666, %696 : vector<2x128xf32>
    %698 = arith.addf %695, %697 : vector<2x128xf32>
    %699 = vector.broadcast %118 : f32 to vector<2x128xf32>
    %700 = arith.mulf %663, %699 : vector<2x128xf32>
    %701 = arith.addf %698, %700 : vector<2x128xf32>
    %702 = vector.broadcast %119 : f32 to vector<2x128xf32>
    %703 = arith.mulf %660, %702 : vector<2x128xf32>
    %704 = arith.addf %701, %703 : vector<2x128xf32>
    %705 = vector.broadcast %120 : f32 to vector<2x128xf32>
    %706 = arith.mulf %657, %705 : vector<2x128xf32>
    %707 = arith.addf %704, %706 : vector<2x128xf32>
    %708 = vector.broadcast %121 : f32 to vector<2x128xf32>
    %709 = arith.mulf %654, %708 : vector<2x128xf32>
    %710 = arith.addf %707, %709 : vector<2x128xf32>
    %711 = vector.broadcast %122 : f32 to vector<2x128xf32>
    %712 = arith.mulf %651, %711 : vector<2x128xf32>
    %713 = arith.addf %710, %712 : vector<2x128xf32>
    %714 = vector.broadcast %123 : f32 to vector<2x128xf32>
    %715 = arith.mulf %648, %714 : vector<2x128xf32>
    %716 = arith.addf %713, %715 : vector<2x128xf32>
    %717 = vector.broadcast %124 : f32 to vector<2x128xf32>
    %718 = arith.mulf %644, %717 : vector<2x128xf32>
    %719 = arith.addf %716, %718 : vector<2x128xf32>
    %720 = vector.broadcast %125 : f32 to vector<2x128xf32>
    %721 = arith.mulf %693, %720 : vector<2x128xf32>
    %722 = arith.addf %719, %721 : vector<2x128xf32>
    %723 = vector.broadcast %126 : f32 to vector<2x128xf32>
    %724 = arith.mulf %690, %723 : vector<2x128xf32>
    %725 = arith.addf %722, %724 : vector<2x128xf32>
    %726 = vector.broadcast %127 : f32 to vector<2x128xf32>
    %727 = arith.mulf %687, %726 : vector<2x128xf32>
    %728 = arith.addf %725, %727 : vector<2x128xf32>
    %729 = vector.broadcast %128 : f32 to vector<2x128xf32>
    %730 = arith.mulf %684, %729 : vector<2x128xf32>
    %731 = arith.addf %728, %730 : vector<2x128xf32>
    %732 = vector.broadcast %129 : f32 to vector<2x128xf32>
    %733 = arith.mulf %681, %732 : vector<2x128xf32>
    %734 = arith.addf %731, %733 : vector<2x128xf32>
    %735 = vector.broadcast %130 : f32 to vector<2x128xf32>
    %736 = arith.mulf %678, %735 : vector<2x128xf32>
    %737 = arith.addf %734, %736 : vector<2x128xf32>
    %738 = vector.broadcast %131 : f32 to vector<2x128xf32>
    %739 = arith.mulf %675, %738 : vector<2x128xf32>
    %740 = arith.addf %737, %739 : vector<2x128xf32>
    %741 = vector.broadcast %132 : f32 to vector<2x128xf32>
    %742 = arith.mulf %672, %741 : vector<2x128xf32>
    %743 = arith.addf %740, %742 : vector<2x128xf32>
    %744 = vector.broadcast %133 : f32 to vector<2x128xf32>
    %745 = arith.mulf %645, %744 : vector<2x128xf32>
    %746 = arith.addf %743, %745 : vector<2x128xf32>
    %747 = vector.broadcast %152 : f32 to vector<2x128xf32>
    %748 = arith.addf %746, %747 : vector<2x128xf32>
    %749 = vector.broadcast %134 : f32 to vector<2x128xf32>
    %750 = arith.mulf %669, %749 : vector<2x128xf32>
    %751 = vector.broadcast %135 : f32 to vector<2x128xf32>
    %752 = arith.mulf %666, %751 : vector<2x128xf32>
    %753 = arith.addf %750, %752 : vector<2x128xf32>
    %754 = vector.broadcast %136 : f32 to vector<2x128xf32>
    %755 = arith.mulf %663, %754 : vector<2x128xf32>
    %756 = arith.addf %753, %755 : vector<2x128xf32>
    %757 = vector.broadcast %137 : f32 to vector<2x128xf32>
    %758 = arith.mulf %660, %757 : vector<2x128xf32>
    %759 = arith.addf %756, %758 : vector<2x128xf32>
    %760 = vector.broadcast %138 : f32 to vector<2x128xf32>
    %761 = arith.mulf %657, %760 : vector<2x128xf32>
    %762 = arith.addf %759, %761 : vector<2x128xf32>
    %763 = vector.broadcast %139 : f32 to vector<2x128xf32>
    %764 = arith.mulf %654, %763 : vector<2x128xf32>
    %765 = arith.addf %762, %764 : vector<2x128xf32>
    %766 = vector.broadcast %140 : f32 to vector<2x128xf32>
    %767 = arith.mulf %651, %766 : vector<2x128xf32>
    %768 = arith.addf %765, %767 : vector<2x128xf32>
    %769 = vector.broadcast %141 : f32 to vector<2x128xf32>
    %770 = arith.mulf %648, %769 : vector<2x128xf32>
    %771 = arith.addf %768, %770 : vector<2x128xf32>
    %772 = vector.broadcast %142 : f32 to vector<2x128xf32>
    %773 = arith.mulf %644, %772 : vector<2x128xf32>
    %774 = arith.addf %771, %773 : vector<2x128xf32>
    %775 = vector.broadcast %143 : f32 to vector<2x128xf32>
    %776 = arith.mulf %693, %775 : vector<2x128xf32>
    %777 = arith.addf %774, %776 : vector<2x128xf32>
    %778 = vector.broadcast %144 : f32 to vector<2x128xf32>
    %779 = arith.mulf %690, %778 : vector<2x128xf32>
    %780 = arith.addf %777, %779 : vector<2x128xf32>
    %781 = vector.broadcast %145 : f32 to vector<2x128xf32>
    %782 = arith.mulf %687, %781 : vector<2x128xf32>
    %783 = arith.addf %780, %782 : vector<2x128xf32>
    %784 = vector.broadcast %146 : f32 to vector<2x128xf32>
    %785 = arith.mulf %684, %784 : vector<2x128xf32>
    %786 = arith.addf %783, %785 : vector<2x128xf32>
    %787 = vector.broadcast %147 : f32 to vector<2x128xf32>
    %788 = arith.mulf %681, %787 : vector<2x128xf32>
    %789 = arith.addf %786, %788 : vector<2x128xf32>
    %790 = vector.broadcast %148 : f32 to vector<2x128xf32>
    %791 = arith.mulf %678, %790 : vector<2x128xf32>
    %792 = arith.addf %789, %791 : vector<2x128xf32>
    %793 = vector.broadcast %149 : f32 to vector<2x128xf32>
    %794 = arith.mulf %675, %793 : vector<2x128xf32>
    %795 = arith.addf %792, %794 : vector<2x128xf32>
    %796 = vector.broadcast %150 : f32 to vector<2x128xf32>
    %797 = arith.mulf %672, %796 : vector<2x128xf32>
    %798 = arith.addf %795, %797 : vector<2x128xf32>
    %799 = vector.broadcast %151 : f32 to vector<2x128xf32>
    %800 = arith.mulf %645, %799 : vector<2x128xf32>
    %801 = arith.addf %798, %800 : vector<2x128xf32>
    %802 = vector.broadcast %153 : f32 to vector<2x128xf32>
    %803 = arith.addf %801, %802 : vector<2x128xf32>
    %804 = arith.addf %748, %215 : vector<2x128xf32>
    %805 = arith.addf %804, %295 : vector<2x128xf32>
    %806 = arith.addf %803, %243 : vector<2x128xf32>
    %807 = arith.addf %806, %323 : vector<2x128xf32>
    %c0_129 = arith.constant 0 : index
    %c0_130 = arith.constant 0 : index
    %808 = vector.load %arg3[%c0_129, %c0_130] : memref<2x128xf32, #tpu.memory_space<vmem>>, vector<2x128xf32>
    tpu.vector_store %arg3[%c0_129, %c0_130], %805 {strides = array<i32>} : memref<2x128xf32, #tpu.memory_space<vmem>>, vector<2x128xf32>,
    %cst_131 = arith.constant 5.000000e-01 : f32
    %809 = vector.broadcast %cst_131 : f32 to vector<2x128xf32>
    %810 = arith.mulf %809, %807 : vector<2x128xf32>
    %811 = math.exp %810 : vector<2x128xf32>
    %c0_132 = arith.constant 0 : index
    %c0_133 = arith.constant 0 : index
    %812 = vector.load %arg4[%c0_132, %c0_133] : memref<2x128xf32, #tpu.memory_space<vmem>>, vector<2x128xf32>
    tpu.vector_store %arg4[%c0_132, %c0_133], %811 {strides = array<i32>} : memref<2x128xf32, #tpu.memory_space<vmem>>, vector<2x128xf32>,
    return
  }
  func.func @transform_0(%arg0: i32) -> i32 {
    %c0_i32 = arith.constant 0 : i32
    %c0_i32_0 = arith.constant 0 : i32
    return %c0_i32 : i32
  }
  func.func @transform_1(%arg0: i32) -> (i32, i32) {
    %c0_i32 = arith.constant 0 : i32
    %c0_i32_0 = arith.constant 0 : i32
    return %arg0, %c0_i32 : i32, i32
  }
  func.func @transform_2(%arg0: i32) -> (i32, i32) {
    %c0_i32 = arith.constant 0 : i32
    %c0_i32_0 = arith.constant 0 : i32
    return %arg0, %c0_i32 : i32, i32
  }
  func.func @transform_3(%arg0: i32) -> (i32, i32) {
    %c0_i32 = arith.constant 0 : i32
    %c0_i32_0 = arith.constant 0 : i32
    return %arg0, %c0_i32 : i32, i32
  }
}

</mosaic_0001>

<llo_original>
// kernel: network_noise2_forward.1
$region0: #{network_noise2_forward.1}
  #allocation0 [shape = 'u32[]', space=smem, size = 0x4, offset = 0x4, fixed_abs, tag = 'smem constant byte address 0x4 - core index']
  #allocation1 [shape = 'u32[144,128]{1,0:T(1,128)}', space=vmem, size = 0x12000, scoped, tag = 'internal scratch']
  %s0 = inlined_call_operand.vmem [shape: f32[154], index: 0, kind: input, shape index: {}]
  %s1 = inlined_call_operand.vmem [shape: f32[2,128], index: 1, kind: input, shape index: {}]
  %s2 = inlined_call_operand.hbm [shape: f32[2,128], index: 2, kind: output, shape index: {0}]
  %s3 = inlined_call_operand.hbm [shape: f32[2,128], index: 3, kind: output, shape index: {1}]
  %4 = xla_tuple %s2, %s3
  %s5 = sld [smem:[#allocation0]]
  $region30: #{network_noise2_forward.1} parent=0
    _
  %s7 = ssub.s32 1, %s5
  %s8 = scalar_select 0, %s7, %s5
  $region1: #{network_noise2_forward.1} parent=0
    #allocation2 [shape = 'u8[1024]{0}', space=smem, size = 0x400, scoped, tag = 'input window, operand 0, single buffered']
    #allocation3 [shape = 's32[1]{0}', space=sflag, size = 0x4, scoped, tag = 'scoped memory for network_noise2_forward.1']
    #allocation4 [shape = 's32[1]{0}', space=sflag, size = 0x4, scoped, tag = 'scoped memory for network_noise2_forward.1']
    #allocation5 [shape = 'u8[1024]{0}', space=vmem, size = 0x400, scoped, tag = 'output window, operand 0, single buffered']
    #allocation6 [shape = 'u8[1024]{0}', space=vmem, size = 0x400, scoped, tag = 'output window, operand 1, single buffered']
    #allocation7 [shape = 's32[1]{0}', space=sflag, size = 0x4, scoped, tag = 'scoped memory for network_noise2_forward.1']
    %9 = vsyncpa [#allocation4], 0
    %10 = vsyncpa [#allocation3], 0
    %11 = vsyncpa [#allocation7], 0
    // Predicated region
    $region2: #{network_noise2_forward.1} parent=1 // pred_check
      _
    $region3: #{network_noise2_forward.1} parent=1 // pred_check_branch
      %13 = sbr.rel (0) target = $region5
    $region4: #{network_noise2_forward.1} parent=1 // pred_region
      %s15 = ssub.s32 32, 32
      %16 = vsyncadd [#allocation4], %s15
      %s18 = sshll.u32 %s0, 4
      %s19 = int_to_ptr.vmem [resolvable:$true] %s18
      %21 = dma.vmem_to_smem %s19, 32, [#allocation2], [#allocation4]
    $region5: #{network_noise2_forward.1} parent=1 // pred_fallthru
      _
    // Predicated region
    $region6: #{network_noise2_forward.1} parent=1 // pred_check
      _
    $region7: #{network_noise2_forward.1} parent=1 // pred_check_branch
      %23 = sbr.rel (0) target = $region9
    $region8: #{network_noise2_forward.1} parent=1 // pred_region
      _
    $region9: #{network_noise2_forward.1} parent=1 // pred_fallthru
      _
    // Predicated region
    $region10: #{network_noise2_forward.1} parent=1 // pred_check
      _
    $region11: #{network_noise2_forward.1} parent=1 // pred_check_branch
      %25 = sbr.rel (0) target = $region13
    $region12: #{network_noise2_forward.1} parent=1 // pred_region
      %26 = dma.done [#allocation4], 32
    $region13: #{network_noise2_forward.1} parent=1 // pred_fallthru
      _
    %27 = sfence
    %s28 = sld [smem:[#allocation2]]
    %s29 = sld [smem:[#allocation2 + $0x1]]
    %s30 = sld [smem:[#allocation2 + $0x2]]
    %s31 = sld [smem:[#allocation2 + $0x3]]
    %s32 = sld [smem:[#allocation2 + $0x4]]
    %s33 = sld [smem:[#allocation2 + $0x5]]
    %s34 = sld [smem:[#allocation2 + $0x6]]
    %s35 = sld [smem:[#allocation2 + $0x7]]
    %s36 = sld [smem:[#allocation2 + $0x8]]
    %s37 = sld [smem:[#allocation2 + $0x9]]
    %s38 = sld [smem:[#allocation2 + $0xa]]
    %s39 = sld [smem:[#allocation2 + $0xb]]
    %s40 = sld [smem:[#allocation2 + $0xc]]
    %s41 = sld [smem:[#allocation2 + $0xd]]
    %s42 = sld [smem:[#allocation2 + $0xe]]
    %s43 = sld [smem:[#allocation2 + $0xf]]
    %s44 = sld [smem:[#allocation2 + $0x10]]
    %s45 = sld [smem:[#allocation2 + $0x11]]
    %s46 = sld [smem:[#allocation2 + $0x12]]
    %s47 = sld [smem:[#allocation2 + $0x13]]
    %s48 = sld [smem:[#allocation2 + $0x14]]
    %s49 = sld [smem:[#allocation2 + $0x15]]
    %s50 = sld [smem:[#allocation2 + $0x16]]
    %s51 = sld [smem:[#allocation2 + $0x17]]
    %s52 = sld [smem:[#allocation2 + $0x18]]
    %s53 = sld [smem:[#allocation2 + $0x19]]
    %s54 = sld [smem:[#allocation2 + $0x1a]]
    %s55 = sld [smem:[#allocation2 + $0x1b]]
    %s56 = sld [smem:[#allocation2 + $0x1c]]
    %s57 = sld [smem:[#allocation2 + $0x1d]]
    %s58 = sld [smem:[#allocation2 + $0x1e]]
    %s59 = sld [smem:[#allocation2 + $0x1f]]
    %s60 = sld [smem:[#allocation2 + $0x20]]
    %s61 = sld [smem:[#allocation2 + $0x21]]
    %s62 = sld [smem:[#allocation2 + $0x22]]
    %s63 = sld [smem:[#allocation2 + $0x23]]
    %s64 = sld [smem:[#allocation2 + $0x24]]
    %s65 = sld [smem:[#allocation2 + $0x25]]
    %s66 = sld [smem:[#allocation2 + $0x26]]
    %s67 = sld [smem:[#allocation2 + $0x27]]
    %s68 = sld [smem:[#allocation2 + $0x28]]
    %s69 = sld [smem:[#allocation2 + $0x29]]
    %s70 = sld [smem:[#allocation2 + $0x2a]]
    %s71 = sld [smem:[#allocation2 + $0x2b]]
    %s72 = sld [smem:[#allocation2 + $0x2c]]
    %s73 = sld [smem:[#allocation2 + $0x2d]]
    %s74 = sld [smem:[#allocation2 + $0x2e]]
    %s75 = sld [smem:[#allocation2 + $0x2f]]
    %s76 = sld [smem:[#allocation2 + $0x30]]
    %s77 = sld [smem:[#allocation2 + $0x31]]
    %s78 = sld [smem:[#allocation2 + $0x32]]
    %s79 = sld [smem:[#allocation2 + $0x33]]
    %s80 = sld [smem:[#allocation2 + $0x34]]
    %s81 = sld [smem:[#allocation2 + $0x35]]
    %s82 = sld [smem:[#allocation2 + $0x36]]
    %s83 = sld [smem:[#allocation2 + $0x37]]
    %s84 = sld [smem:[#allocation2 + $0x38]]
    %s85 = sld [smem:[#allocation2 + $0x39]]
    %s86 = sld [smem:[#allocation2 + $0x3a]]
    %s87 = sld [smem:[#allocation2 + $0x3b]]
    %s88 = sld [smem:[#allocation2 + $0x3c]]
    %s89 = sld [smem:[#allocation2 + $0x3d]]
    %s90 = sld [smem:[#allocation2 + $0x3e]]
    %s91 = sld [smem:[#allocation2 + $0x3f]]
    %s92 = sld [smem:[#allocation2 + $0x40]]
    %s93 = sld [smem:[#allocation2 + $0x41]]
    %s94 = sld [smem:[#allocation2 + $0x42]]
    %s95 = sld [smem:[#allocation2 + $0x43]]
    %s96 = sld [smem:[#allocation2 + $0x44]]
    %s97 = sld [smem:[#allocation2 + $0x45]]
    %s98 = sld [smem:[#allocation2 + $0x46]]
    %s99 = sld [smem:[#allocation2 + $0x47]]
    %s100 = sld [smem:[#allocation2 + $0x48]]
    %s101 = sld [smem:[#allocation2 + $0x49]]
    %s102 = sld [smem:[#allocation2 + $0x4a]]
    %s103 = sld [smem:[#allocation2 + $0x4b]]
    %s104 = sld [smem:[#allocation2 + $0x4c]]
    %s105 = sld [smem:[#allocation2 + $0x4d]]
    %s106 = sld [smem:[#allocation2 + $0x4e]]
    %s107 = sld [smem:[#allocation2 + $0x4f]]
    %s108 = sld [smem:[#allocation2 + $0x50]]
    %s109 = sld [smem:[#allocation2 + $0x51]]
    %s110 = sld [smem:[#allocation2 + $0x52]]
    %s111 = sld [smem:[#allocation2 + $0x53]]
    %s112 = sld [smem:[#allocation2 + $0x54]]
    %s113 = sld [smem:[#allocation2 + $0x55]]
    %s114 = sld [smem:[#allocation2 + $0x56]]
    %s115 = sld [smem:[#allocation2 + $0x57]]
    %s116 = sld [smem:[#allocation2 + $0x58]]
    %s117 = sld [smem:[#allocation2 + $0x59]]
    %s118 = sld [smem:[#allocation2 + $0x5a]]
    %s119 = sld [smem:[#allocation2 + $0x5b]]
    %s120 = sld [smem:[#allocation2 + $0x5c]]
    %s121 = sld [smem:[#allocation2 + $0x5d]]
    %s122 = sld [smem:[#allocation2 + $0x5e]]
    %s123 = sld [smem:[#allocation2 + $0x5f]]
    %s124 = sld [smem:[#allocation2 + $0x60]]
    %s125 = sld [smem:[#allocation2 + $0x61]]
    %s126 = sld [smem:[#allocation2 + $0x62]]
    %s127 = sld [smem:[#allocation2 + $0x63]]
    %s128 = sld [smem:[#allocation2 + $0x64]]
    %s129 = sld [smem:[#allocation2 + $0x65]]
    %s130 = sld [smem:[#allocation2 + $0x66]]
    %s131 = sld [smem:[#allocation2 + $0x67]]
    %s132 = sld [smem:[#allocation2 + $0x68]]
    %s133 = sld [smem:[#allocation2 + $0x69]]
    %s134 = sld [smem:[#allocation2 + $0x6a]]
    %s135 = sld [smem:[#allocation2 + $0x6b]]
    %s136 = sld [smem:[#allocation2 + $0x6c]]
    %s137 = sld [smem:[#allocation2 + $0x6d]]
    %s138 = sld [smem:[#allocation2 + $0x6e]]
    %s139 = sld [smem:[#allocation2 + $0x6f]]
    %s140 = sld [smem:[#allocation2 + $0x70]]
    %s141 = sld [smem:[#allocation2 + $0x71]]
    %s142 = sld [smem:[#allocation2 + $0x72]]
    %s143 = sld [smem:[#allocation2 + $0x73]]
    %s144 = sld [smem:[#allocation2 + $0x74]]
    %s145 = sld [smem:[#allocation2 + $0x75]]
    %s146 = sld [smem:[#allocation2 + $0x76]]
    %s147 = sld [smem:[#allocation2 + $0x77]]
    %s148 = sld [smem:[#allocation2 + $0x78]]
    %s149 = sld [smem:[#allocation2 + $0x79]]
    %s150 = sld [smem:[#allocation2 + $0x7a]]
    %s151 = sld [smem:[#allocation2 + $0x7b]]
    %s152 = sld [smem:[#allocation2 + $0x7c]]
    %s153 = sld [smem:[#allocation2 + $0x7d]]
    %s154 = sld [smem:[#allocation2 + $0x7e]]
    %s155 = sld [smem:[#allocation2 + $0x7f]]
    %s156 = sld [smem:[#allocation2 + $0x80]]
    %s157 = sld [smem:[#allocation2 + $0x81]]
    %s158 = sld [smem:[#allocation2 + $0x82]]
    %s159 = sld [smem:[#allocation2 + $0x83]]
    %s160 = sld [smem:[#allocation2 + $0x84]]
    %s161 = sld [smem:[#allocation2 + $0x85]]
    %s162 = sld [smem:[#allocation2 + $0x86]]
    %s163 = sld [smem:[#allocation2 + $0x87]]
    %s164 = sld [smem:[#allocation2 + $0x88]]
    %s165 = sld [smem:[#allocation2 + $0x89]]
    %s166 = sld [smem:[#allocation2 + $0x8a]]
    %s167 = sld [smem:[#allocation2 + $0x8b]]
    %s168 = sld [smem:[#allocation2 + $0x8c]]
    %s169 = sld [smem:[#allocation2 + $0x8d]]
    %s170 = sld [smem:[#allocation2 + $0x8e]]
    %s171 = sld [smem:[#allocation2 + $0x8f]]
    %s172 = sld [smem:[#allocation2 + $0x90]]
    %s173 = sld [smem:[#allocation2 + $0x91]]
    %s174 = sld [smem:[#allocation2 + $0x92]]
    %s175 = sld [smem:[#allocation2 + $0x93]]
    %s176 = sld [smem:[#allocation2 + $0x94]]
    %s177 = sld [smem:[#allocation2 + $0x95]]
    %s178 = sld [smem:[#allocation2 + $0x96]]
    %s179 = sld [smem:[#allocation2 + $0x97]]
    %s180 = sld [smem:[#allocation2 + $0x98]]
    %s181 = sld [smem:[#allocation2 + $0x99]]
    %v182 = vld [vmem:[%s1] sm:$0x3]
    %v183 = vlaneseq
    %v184 = vand.u32 %v183, 127
    %vm185 = vcmp.ge.s32.totalorder %v184, 1
    %vm186 = vcmp.ge.s32.totalorder %v184, 2
    %vm187 = vcmp.ge.s32.totalorder %v184, 4
    %vm188 = vcmp.ge.s32.totalorder %v184, 8
    %189 = vrot.lane.b32.xlu0 %v182, 1
    %v190 = vpop.permute.xlu0 %189
    %v191 = vsel %vm185, %v190, 0.0
    %192 = vrot.lane.b32.xlu0 %v191, 1
    %v193 = vpop.permute.xlu0 %192
    %v194 = vsel %vm185, %v193, 0.0
    %195 = vrot.lane.b32.xlu0 %v194, 1
    %v196 = vpop.permute.xlu0 %195
    %v197 = vsel %vm185, %v196, 0.0
    %198 = vrot.lane.b32.xlu0 %v197, 1
    %v199 = vpop.permute.xlu0 %198
    %v200 = vsel %vm185, %v199, 0.0
    %201 = vrot.lane.b32.xlu0 %v200, 1
    %v202 = vpop.permute.xlu0 %201
    %v203 = vsel %vm185, %v202, 0.0
    %204 = vrot.lane.b32.xlu0 %v203, 1
    %v205 = vpop.permute.xlu0 %204
    %v206 = vsel %vm185, %v205, 0.0
    %207 = vrot.lane.b32.xlu0 %v206, 1
    %v208 = vpop.permute.xlu0 %207
    %v209 = vsel %vm185, %v208, 0.0
    %210 = vrot.lane.b32.xlu0 %v209, 1
    %v211 = vpop.permute.xlu0 %210
    %v212 = vsel %vm185, %v211, 0.0
    %v213 = vstv %s28
    %v214 = vmul.f32 %v212, %v213
    %v215 = vstv %s29
    %v216 = vmul.f32 %v209, %v215
    %v217 = vadd.f32 %v214, %v216
    %v218 = vstv %s30
    %v219 = vmul.f32 %v206, %v218
    %v220 = vadd.f32 %v217, %v219
    %v221 = vstv %s31
    %v222 = vmul.f32 %v203, %v221
    %v223 = vadd.f32 %v220, %v222
    %v224 = vstv %s32
    %v225 = vmul.f32 %v200, %v224
    %v226 = vadd.f32 %v223, %v225
    %v227 = vstv %s33
    %v228 = vmul.f32 %v197, %v227
    %v229 = vadd.f32 %v226, %v228
    %v230 = vstv %s34
    %v231 = vmul.f32 %v194, %v230
    %v232 = vadd.f32 %v229, %v231
    %v233 = vstv %s35
    %v234 = vmul.f32 %v191, %v233
    %v235 = vadd.f32 %v232, %v234
    %v236 = vstv %s36
    %v237 = vmul.f32 %v182, %v236
    %v238 = vadd.f32 %v235, %v237
    %v239 = vstv %s46
    %v240 = vadd.f32 %v238, %v239
    %v241 = vstv %s37
    %v242 = vmul.f32 %v212, %v241
    %v243 = vstv %s38
    %v244 = vmul.f32 %v209, %v243
    %v245 = vadd.f32 %v242, %v244
    %v246 = vstv %s39
    %v247 = vmul.f32 %v206, %v246
    %v248 = vadd.f32 %v245, %v247
    %v249 = vstv %s40
    %v250 = vmul.f32 %v203, %v249
    %v251 = vadd.f32 %v248, %v250
    %v252 = vstv %s41
    %v253 = vmul.f32 %v200, %v252
    %v254 = vadd.f32 %v251, %v253
    %v255 = vstv %s42
    %v256 = vmul.f32 %v197, %v255
    %v257 = vadd.f32 %v254, %v256
    %v258 = vstv %s43
    %v259 = vmul.f32 %v194, %v258
    %v260 = vadd.f32 %v257, %v259
    %v261 = vstv %s44
    %v262 = vmul.f32 %v191, %v261
    %v263 = vadd.f32 %v260, %v262
    %v264 = vstv %s45
    %v265 = vmul.f32 %v182, %v264
    %v266 = vadd.f32 %v263, %v265
    %v267 = vstv %s47
    %v268 = vadd.f32 %v266, %v267
    %269 = vrot.lane.b32.xlu0 %v182, 8
    %v270 = vpop.permute.xlu0 %269
    %v271 = vsel %vm188, %v270, 0.0
    %272 = vrot.lane.b32.xlu0 %v271, 8
    %v273 = vpop.permute.xlu0 %272
    %v274 = vsel %vm188, %v273, 0.0
    %275 = vrot.lane.b32.xlu0 %v274, 8
    %v276 = vpop.permute.xlu0 %275
    %v277 = vsel %vm188, %v276, 0.0
    %278 = vrot.lane.b32.xlu0 %v277, 8
    %v279 = vpop.permute.xlu0 %278
    %v280 = vsel %vm188, %v279, 0.0
    %281 = vrot.lane.b32.xlu0 %v280, 8
    %v282 = vpop.permute.xlu0 %281
    %v283 = vsel %vm188, %v282, 0.0
    %284 = vrot.lane.b32.xlu0 %v283, 8
    %v285 = vpop.permute.xlu0 %284
    %v286 = vsel %vm188, %v285, 0.0
    %287 = vrot.lane.b32.xlu0 %v286, 8
    %v288 = vpop.permute.xlu0 %287
    %v289 = vsel %vm188, %v288, 0.0
    %290 = vrot.lane.b32.xlu0 %v289, 8
    %v291 = vpop.permute.xlu0 %290
    %v292 = vsel %vm188, %v291, 0.0
    %v293 = vstv %s48
    %v294 = vmul.f32 %v292, %v293
    %v295 = vstv %s49
    %v296 = vmul.f32 %v289, %v295
    %v297 = vadd.f32 %v294, %v296
    %v298 = vstv %s50
    %v299 = vmul.f32 %v286, %v298
    %v300 = vadd.f32 %v297, %v299
    %v301 = vstv %s51
    %v302 = vmul.f32 %v283, %v301
    %v303 = vadd.f32 %v300, %v302
    %v304 = vstv %s52
    %v305 = vmul.f32 %v280, %v304
    %v306 = vadd.f32 %v303, %v305
    %v307 = vstv %s53
    %v308 = vmul.f32 %v277, %v307
    %v309 = vadd.f32 %v306, %v308
    %v310 = vstv %s54
    %v311 = vmul.f32 %v274, %v310
    %v312 = vadd.f32 %v309, %v311
    %v313 = vstv %s55
    %v314 = vmul.f32 %v271, %v313
    %v315 = vadd.f32 %v312, %v314
    %v316 = vstv %s56
    %v317 = vmul.f32 %v182, %v316
    %v318 = vadd.f32 %v315, %v317
    %v319 = vstv %s66
    %v320 = vadd.f32 %v318, %v319
    %v321 = vstv %s57
    %v322 = vmul.f32 %v292, %v321
    %v323 = vstv %s58
    %v324 = vmul.f32 %v289, %v323
    %v325 = vadd.f32 %v322, %v324
    %v326 = vstv %s59
    %v327 = vmul.f32 %v286, %v326
    %v328 = vadd.f32 %v325, %v327
    %v329 = vstv %s60
    %v330 = vmul.f32 %v283, %v329
    %v331 = vadd.f32 %v328, %v330
    %v332 = vstv %s61
    %v333 = vmul.f32 %v280, %v332
    %v334 = vadd.f32 %v331, %v333
    %v335 = vstv %s62
    %v336 = vmul.f32 %v277, %v335
    %v337 = vadd.f32 %v334, %v336
    %v338 = vstv %s63
    %v339 = vmul.f32 %v274, %v338
    %v340 = vadd.f32 %v337, %v339
    %v341 = vstv %s64
    %v342 = vmul.f32 %v271, %v341
    %v343 = vadd.f32 %v340, %v342
    %v344 = vstv %s65
    %v345 = vmul.f32 %v182, %v344
    %v346 = vadd.f32 %v343, %v345
    %v347 = vstv %s67
    %v348 = vadd.f32 %v346, %v347
    %v349 = vtanh.pop %v240
    %v350 = vtanh.pop %v268
    %351 = vrot.lane.b32.xlu0 %v349, 2
    %v352 = vpop.permute.xlu0 %351
    %v353 = vsel %vm186, %v352, 0.0
    %354 = vrot.lane.b32.xlu0 %v353, 2
    %v355 = vpop.permute.xlu0 %354
    %v356 = vsel %vm186, %v355, 0.0
    %357 = vrot.lane.b32.xlu0 %v356, 2
    %v358 = vpop.permute.xlu0 %357
    %v359 = vsel %vm186, %v358, 0.0
    %360 = vrot.lane.b32.xlu0 %v359, 2
    %v361 = vpop.permute.xlu0 %360
    %v362 = vsel %vm186, %v361, 0.0
    %363 = vrot.lane.b32.xlu0 %v362, 2
    %v364 = vpop.permute.xlu0 %363
    %v365 = vsel %vm186, %v364, 0.0
    %366 = vrot.lane.b32.xlu0 %v365, 2
    %v367 = vpop.permute.xlu0 %366
    %v368 = vsel %vm186, %v367, 0.0
    %369 = vrot.lane.b32.xlu0 %v368, 2
    %v370 = vpop.permute.xlu0 %369
    %v371 = vsel %vm186, %v370, 0.0
    %372 = vrot.lane.b32.xlu0 %v371, 2
    %v373 = vpop.permute.xlu0 %372
    %v374 = vsel %vm186, %v373, 0.0
    %375 = vrot.lane.b32.xlu0 %v350, 2
    %v376 = vpop.permute.xlu0 %375
    %v377 = vsel %vm186, %v376, 0.0
    %378 = vrot.lane.b32.xlu0 %v377, 2
    %v379 = vpop.permute.xlu0 %378
    %v380 = vsel %vm186, %v379, 0.0
    %381 = vrot.lane.b32.xlu0 %v380, 2
    %v382 = vpop.permute.xlu0 %381
    %v383 = vsel %vm186, %v382, 0.0
    %384 = vrot.lane.b32.xlu0 %v383, 2
    %v385 = vpop.permute.xlu0 %384
    %v386 = vsel %vm186, %v385, 0.0
    %387 = vrot.lane.b32.xlu0 %v386, 2
    %v388 = vpop.permute.xlu0 %387
    %v389 = vsel %vm186, %v388, 0.0
    %390 = vrot.lane.b32.xlu0 %v389, 2
    %v391 = vpop.permute.xlu0 %390
    %v392 = vsel %vm186, %v391, 0.0
    %393 = vrot.lane.b32.xlu0 %v392, 2
    %v394 = vpop.permute.xlu0 %393
    %v395 = vsel %vm186, %v394, 0.0
    %396 = vrot.lane.b32.xlu0 %v395, 2
    %v397 = vpop.permute.xlu0 %396
    %v398 = vsel %vm186, %v397, 0.0
    %v399 = vstv %s68
    %v400 = vmul.f32 %v374, %v399
    %v401 = vstv %s69
    %v402 = vmul.f32 %v371, %v401
    %v403 = vadd.f32 %v400, %v402
    %v404 = vstv %s70
    %v405 = vmul.f32 %v368, %v404
    %v406 = vadd.f32 %v403, %v405
    %v407 = vstv %s71
    %v408 = vmul.f32 %v365, %v407
    %v409 = vadd.f32 %v406, %v408
    %v410 = vstv %s72
    %v411 = vmul.f32 %v362, %v410
    %v412 = vadd.f32 %v409, %v411
    %v413 = vstv %s73
    %v414 = vmul.f32 %v359, %v413
    %v415 = vadd.f32 %v412, %v414
    %v416 = vstv %s74
    %v417 = vmul.f32 %v356, %v416
    %v418 = vadd.f32 %v415, %v417
    %v419 = vstv %s75
    %v420 = vmul.f32 %v353, %v419
    %v421 = vadd.f32 %v418, %v420
    %v422 = vstv %s76
    %v423 = vmul.f32 %v349, %v422
    %v424 = vadd.f32 %v421, %v423
    %v425 = vstv %s77
    %v426 = vmul.f32 %v398, %v425
    %v427 = vadd.f32 %v424, %v426
    %v428 = vstv %s78
    %v429 = vmul.f32 %v395, %v428
    %v430 = vadd.f32 %v427, %v429
    %v431 = vstv %s79
    %v432 = vmul.f32 %v392, %v431
    %v433 = vadd.f32 %v430, %v432
    %v434 = vstv %s80
    %v435 = vmul.f32 %v389, %v434
    %v436 = vadd.f32 %v433, %v435
    %v437 = vstv %s81
    %v438 = vmul.f32 %v386, %v437
    %v439 = vadd.f32 %v436, %v438
    %v440 = vstv %s82
    %v441 = vmul.f32 %v383, %v440
    %v442 = vadd.f32 %v439, %v441
    %v443 = vstv %s83
    %v444 = vmul.f32 %v380, %v443
    %v445 = vadd.f32 %v442, %v444
    %v446 = vstv %s84
    %v447 = vmul.f32 %v377, %v446
    %v448 = vadd.f32 %v445, %v447
    %v449 = vstv %s85
    %v450 = vmul.f32 %v350, %v449
    %v451 = vadd.f32 %v448, %v450
    %v452 = vstv %s104
    %v453 = vadd.f32 %v451, %v452
    %v454 = vstv %s86
    %v455 = vmul.f32 %v374, %v454
    %v456 = vstv %s87
    %v457 = vmul.f32 %v371, %v456
    %v458 = vadd.f32 %v455, %v457
    %v459 = vstv %s88
    %v460 = vmul.f32 %v368, %v459
    %v461 = vadd.f32 %v458, %v460
    %v462 = vstv %s89
    %v463 = vmul.f32 %v365, %v462
    %v464 = vadd.f32 %v461, %v463
    %v465 = vstv %s90
    %v466 = vmul.f32 %v362, %v465
    %v467 = vadd.f32 %v464, %v466
    %v468 = vstv %s91
    %v469 = vmul.f32 %v359, %v468
    %v470 = vadd.f32 %v467, %v469
    %v471 = vstv %s92
    %v472 = vmul.f32 %v356, %v471
    %v473 = vadd.f32 %v470, %v472
    %v474 = vstv %s93
    %v475 = vmul.f32 %v353, %v474
    %v476 = vadd.f32 %v473, %v475
    %v477 = vstv %s94
    %v478 = vmul.f32 %v349, %v477
    %v479 = vadd.f32 %v476, %v478
    %v480 = vstv %s95
    %v481 = vmul.f32 %v398, %v480
    %v482 = vadd.f32 %v479, %v481
    %v483 = vstv %s96
    %v484 = vmul.f32 %v395, %v483
    %v485 = vadd.f32 %v482, %v484
    %v486 = vstv %s97
    %v487 = vmul.f32 %v392, %v486
    %v488 = vadd.f32 %v485, %v487
    %v489 = vstv %s98
    %v490 = vmul.f32 %v389, %v489
    %v491 = vadd.f32 %v488, %v490
    %v492 = vstv %s99
    %v493 = vmul.f32 %v386, %v492
    %v494 = vadd.f32 %v491, %v493
    %v495 = vstv %s100
    %v496 = vmul.f32 %v383, %v495
    %v497 = vadd.f32 %v494, %v496
    %v498 = vstv %s101
    %v499 = vmul.f32 %v380, %v498
    %v500 = vadd.f32 %v497, %v499
    %v501 = vstv %s102
    %v502 = vmul.f32 %v377, %v501
    %v503 = vadd.f32 %v500, %v502
    %v504 = vstv %s103
    %v505 = vmul.f32 %v350, %v504
    %v506 = vadd.f32 %v503, %v505
    %v507 = vstv %s105
    %v508 = vadd.f32 %v506, %v507
    %v509 = vtanh.pop %v453
    %v510 = vtanh.pop %v508
    %511 = vrot.lane.b32.xlu0 %v509, 4
    %v512 = vpop.permute.xlu0 %511
    %v513 = vsel %vm187, %v512, 0.0
    %514 = vrot.lane.b32.xlu0 %v513, 4
    %v515 = vpop.permute.xlu0 %514
    %v516 = vsel %vm187, %v515, 0.0
    %517 = vrot.lane.b32.xlu0 %v516, 4
    %v518 = vpop.permute.xlu0 %517
    %v519 = vsel %vm187, %v518, 0.0
    %520 = vrot.lane.b32.xlu0 %v519, 4
    %v521 = vpop.permute.xlu0 %520
    %v522 = vsel %vm187, %v521, 0.0
    %523 = vrot.lane.b32.xlu0 %v522, 4
    %v524 = vpop.permute.xlu0 %523
    %v525 = vsel %vm187, %v524, 0.0
    %526 = vrot.lane.b32.xlu0 %v525, 4
    %v527 = vpop.permute.xlu0 %526
    %v528 = vsel %vm187, %v527, 0.0
    %529 = vrot.lane.b32.xlu0 %v528, 4
    %v530 = vpop.permute.xlu0 %529
    %v531 = vsel %vm187, %v530, 0.0
    %532 = vrot.lane.b32.xlu0 %v531, 4
    %v533 = vpop.permute.xlu0 %532
    %v534 = vsel %vm187, %v533, 0.0
    %535 = vrot.lane.b32.xlu0 %v510, 4
    %v536 = vpop.permute.xlu0 %535
    %v537 = vsel %vm187, %v536, 0.0
    %538 = vrot.lane.b32.xlu0 %v537, 4
    %v539 = vpop.permute.xlu0 %538
    %v540 = vsel %vm187, %v539, 0.0
    %541 = vrot.lane.b32.xlu0 %v540, 4
    %v542 = vpop.permute.xlu0 %541
    %v543 = vsel %vm187, %v542, 0.0
    %544 = vrot.lane.b32.xlu0 %v543, 4
    %v545 = vpop.permute.xlu0 %544
    %v546 = vsel %vm187, %v545, 0.0
    %547 = vrot.lane.b32.xlu0 %v546, 4
    %v548 = vpop.permute.xlu0 %547
    %v549 = vsel %vm187, %v548, 0.0
    %550 = vrot.lane.b32.xlu0 %v549, 4
    %v551 = vpop.permute.xlu0 %550
    %v552 = vsel %vm187, %v551, 0.0
    %553 = vrot.lane.b32.xlu0 %v552, 4
    %v554 = vpop.permute.xlu0 %553
    %v555 = vsel %vm187, %v554, 0.0
    %556 = vrot.lane.b32.xlu0 %v555, 4
    %v557 = vpop.permute.xlu0 %556
    %v558 = vsel %vm187, %v557, 0.0
    %v559 = vstv %s106
    %v560 = vmul.f32 %v534, %v559
    %v561 = vstv %s107
    %v562 = vmul.f32 %v531, %v561
    %v563 = vadd.f32 %v560, %v562
    %v564 = vstv %s108
    %v565 = vmul.f32 %v528, %v564
    %v566 = vadd.f32 %v563, %v565
    %v567 = vstv %s109
    %v568 = vmul.f32 %v525, %v567
    %v569 = vadd.f32 %v566, %v568
    %v570 = vstv %s110
    %v571 = vmul.f32 %v522, %v570
    %v572 = vadd.f32 %v569, %v571
    %v573 = vstv %s111
    %v574 = vmul.f32 %v519, %v573
    %v575 = vadd.f32 %v572, %v574
    %v576 = vstv %s112
    %v577 = vmul.f32 %v516, %v576
    %v578 = vadd.f32 %v575, %v577
    %v579 = vstv %s113
    %v580 = vmul.f32 %v513, %v579
    %v581 = vadd.f32 %v578, %v580
    %v582 = vstv %s114
    %v583 = vmul.f32 %v509, %v582
    %v584 = vadd.f32 %v581, %v583
    %v585 = vstv %s115
    %v586 = vmul.f32 %v558, %v585
    %v587 = vadd.f32 %v584, %v586
    %v588 = vstv %s116
    %v589 = vmul.f32 %v555, %v588
    %v590 = vadd.f32 %v587, %v589
    %v591 = vstv %s117
    %v592 = vmul.f32 %v552, %v591
    %v593 = vadd.f32 %v590, %v592
    %v594 = vstv %s118
    %v595 = vmul.f32 %v549, %v594
    %v596 = vadd.f32 %v593, %v595
    %v597 = vstv %s119
    %v598 = vmul.f32 %v546, %v597
    %v599 = vadd.f32 %v596, %v598
    %v600 = vstv %s120
    %v601 = vmul.f32 %v543, %v600
    %v602 = vadd.f32 %v599, %v601
    %v603 = vstv %s121
    %v604 = vmul.f32 %v540, %v603
    %v605 = vadd.f32 %v602, %v604
    %v606 = vstv %s122
    %v607 = vmul.f32 %v537, %v606
    %v608 = vadd.f32 %v605, %v607
    %v609 = vstv %s123
    %v610 = vmul.f32 %v510, %v609
    %v611 = vadd.f32 %v608, %v610
    %v612 = vstv %s142
    %v613 = vadd.f32 %v611, %v612
    %v614 = vstv %s124
    %v615 = vmul.f32 %v534, %v614
    %v616 = vstv %s125
    %v617 = vmul.f32 %v531, %v616
    %v618 = vadd.f32 %v615, %v617
    %v619 = vstv %s126
    %v620 = vmul.f32 %v528, %v619
    %v621 = vadd.f32 %v618, %v620
    %v622 = vstv %s127
    %v623 = vmul.f32 %v525, %v622
    %v624 = vadd.f32 %v621, %v623
    %v625 = vstv %s128
    %v626 = vmul.f32 %v522, %v625
    %v627 = vadd.f32 %v624, %v626
    %v628 = vstv %s129
    %v629 = vmul.f32 %v519, %v628
    %v630 = vadd.f32 %v627, %v629
    %v631 = vstv %s130
    %v632 = vmul.f32 %v516, %v631
    %v633 = vadd.f32 %v630, %v632
    %v634 = vstv %s131
    %v635 = vmul.f32 %v513, %v634
    %v636 = vadd.f32 %v633, %v635
    %v637 = vstv %s132
    %v638 = vmul.f32 %v509, %v637
    %v639 = vadd.f32 %v636, %v638
    %v640 = vstv %s133
    %v641 = vmul.f32 %v558, %v640
    %v642 = vadd.f32 %v639, %v641
    %v643 = vstv %s134
    %v644 = vmul.f32 %v555, %v643
    %v645 = vadd.f32 %v642, %v644
    %v646 = vstv %s135
    %v647 = vmul.f32 %v552, %v646
    %v648 = vadd.f32 %v645, %v647
    %v649 = vstv %s136
    %v650 = vmul.f32 %v549, %v649
    %v651 = vadd.f32 %v648, %v650
    %v652 = vstv %s137
    %v653 = vmul.f32 %v546, %v652
    %v654 = vadd.f32 %v651, %v653
    %v655 = vstv %s138
    %v656 = vmul.f32 %v543, %v655
    %v657 = vadd.f32 %v654, %v656
    %v658 = vstv %s139
    %v659 = vmul.f32 %v540, %v658
    %v660 = vadd.f32 %v657, %v659
    %v661 = vstv %s140
    %v662 = vmul.f32 %v537, %v661
    %v663 = vadd.f32 %v660, %v662
    %v664 = vstv %s141
    %v665 = vmul.f32 %v510, %v664
    %v666 = vadd.f32 %v663, %v665
    %v667 = vstv %s143
    %v668 = vadd.f32 %v666, %v667
    %v669 = vtanh.pop %v613
    %v670 = vtanh.pop %v668
    %671 = vrot.lane.b32.xlu0 %v669, 8
    %v672 = vpop.permute.xlu0 %671
    %v673 = vsel %vm188, %v672, 0.0
    %674 = vrot.lane.b32.xlu0 %v673, 8
    %v675 = vpop.permute.xlu0 %674
    %v676 = vsel %vm188, %v675, 0.0
    %677 = vrot.lane.b32.xlu0 %v676, 8
    %v678 = vpop.permute.xlu0 %677
    %v679 = vsel %vm188, %v678, 0.0
    %680 = vrot.lane.b32.xlu0 %v679, 8
    %v681 = vpop.permute.xlu0 %680
    %v682 = vsel %vm188, %v681, 0.0
    %683 = vrot.lane.b32.xlu0 %v682, 8
    %v684 = vpop.permute.xlu0 %683
    %v685 = vsel %vm188, %v684, 0.0
    %686 = vrot.lane.b32.xlu0 %v685, 8
    %v687 = vpop.permute.xlu0 %686
    %v688 = vsel %vm188, %v687, 0.0
    %689 = vrot.lane.b32.xlu0 %v688, 8
    %v690 = vpop.permute.xlu0 %689
    %v691 = vsel %vm188, %v690, 0.0
    %692 = vrot.lane.b32.xlu0 %v691, 8
    %v693 = vpop.permute.xlu0 %692
    %v694 = vsel %vm188, %v693, 0.0
    %695 = vrot.lane.b32.xlu0 %v670, 8
    %v696 = vpop.permute.xlu0 %695
    %v697 = vsel %vm188, %v696, 0.0
    %698 = vrot.lane.b32.xlu0 %v697, 8
    %v699 = vpop.permute.xlu0 %698
    %v700 = vsel %vm188, %v699, 0.0
    %701 = vrot.lane.b32.xlu0 %v700, 8
    %v702 = vpop.permute.xlu0 %701
    %v703 = vsel %vm188, %v702, 0.0
    %704 = vrot.lane.b32.xlu0 %v703, 8
    %v705 = vpop.permute.xlu0 %704
    %v706 = vsel %vm188, %v705, 0.0
    %707 = vrot.lane.b32.xlu0 %v706, 8
    %v708 = vpop.permute.xlu0 %707
    %v709 = vsel %vm188, %v708, 0.0
    %710 = vrot.lane.b32.xlu0 %v709, 8
    %v711 = vpop.permute.xlu0 %710
    %v712 = vsel %vm188, %v711, 0.0
    %713 = vrot.lane.b32.xlu0 %v712, 8
    %v714 = vpop.permute.xlu0 %713
    %v715 = vsel %vm188, %v714, 0.0
    %716 = vrot.lane.b32.xlu0 %v715, 8
    %v717 = vpop.permute.xlu0 %716
    %v718 = vsel %vm188, %v717, 0.0
    %v719 = vstv %s144
    %v720 = vmul.f32 %v694, %v719
    %v721 = vstv %s145
    %v722 = vmul.f32 %v691, %v721
    %v723 = vadd.f32 %v720, %v722
    %v724 = vstv %s146
    %v725 = vmul.f32 %v688, %v724
    %v726 = vadd.f32 %v723, %v725
    %v727 = vstv %s147
    %v728 = vmul.f32 %v685, %v727
    %v729 = vadd.f32 %v726, %v728
    %v730 = vstv %s148
    %v731 = vmul.f32 %v682, %v730
    %v732 = vadd.f32 %v729, %v731
    %v733 = vstv %s149
    %v734 = vmul.f32 %v679, %v733
    %v735 = vadd.f32 %v732, %v734
    %v736 = vstv %s150
    %v737 = vmul.f32 %v676, %v736
    %v738 = vadd.f32 %v735, %v737
    %v739 = vstv %s151
    %v740 = vmul.f32 %v673, %v739
    %v741 = vadd.f32 %v738, %v740
    %v742 = vstv %s152
    %v743 = vmul.f32 %v669, %v742
    %v744 = vadd.f32 %v741, %v743
    %v745 = vstv %s153
    %v746 = vmul.f32 %v718, %v745
    %v747 = vadd.f32 %v744, %v746
    %v748 = vstv %s154
    %v749 = vmul.f32 %v715, %v748
    %v750 = vadd.f32 %v747, %v749
    %v751 = vstv %s155
    %v752 = vmul.f32 %v712, %v751
    %v753 = vadd.f32 %v750, %v752
    %v754 = vstv %s156
    %v755 = vmul.f32 %v709, %v754
    %v756 = vadd.f32 %v753, %v755
    %v757 = vstv %s157
    %v758 = vmul.f32 %v706, %v757
    %v759 = vadd.f32 %v756, %v758
    %v760 = vstv %s158
    %v761 = vmul.f32 %v703, %v760
    %v762 = vadd.f32 %v759, %v761
    %v763 = vstv %s159
    %v764 = vmul.f32 %v700, %v763
    %v765 = vadd.f32 %v762, %v764
    %v766 = vstv %s160
    %v767 = vmul.f32 %v697, %v766
    %v768 = vadd.f32 %v765, %v767
    %v769 = vstv %s161
    %v770 = vmul.f32 %v670, %v769
    %v771 = vadd.f32 %v768, %v770
    %v772 = vstv %s180
    %v773 = vadd.f32 %v771, %v772
    %v774 = vstv %s162
    %v775 = vmul.f32 %v694, %v774
    %v776 = vstv %s163
    %v777 = vmul.f32 %v691, %v776
    %v778 = vadd.f32 %v775, %v777
    %v779 = vstv %s164
    %v780 = vmul.f32 %v688, %v779
    %v781 = vadd.f32 %v778, %v780
    %v782 = vstv %s165
    %v783 = vmul.f32 %v685, %v782
    %v784 = vadd.f32 %v781, %v783
    %v785 = vstv %s166
    %v786 = vmul.f32 %v682, %v785
    %v787 = vadd.f32 %v784, %v786
    %v788 = vstv %s167
    %v789 = vmul.f32 %v679, %v788
    %v790 = vadd.f32 %v787, %v789
    %v791 = vstv %s168
    %v792 = vmul.f32 %v676, %v791
    %v793 = vadd.f32 %v790, %v792
    %v794 = vstv %s169
    %v795 = vmul.f32 %v673, %v794
    %v796 = vadd.f32 %v793, %v795
    %v797 = vstv %s170
    %v798 = vmul.f32 %v669, %v797
    %v799 = vadd.f32 %v796, %v798
    %v800 = vstv %s171
    %v801 = vmul.f32 %v718, %v800
    %v802 = vadd.f32 %v799, %v801
    %v803 = vstv %s172
    %v804 = vmul.f32 %v715, %v803
    %v805 = vadd.f32 %v802, %v804
    %v806 = vstv %s173
    %v807 = vmul.f32 %v712, %v806
    %v808 = vadd.f32 %v805, %v807
    %v809 = vstv %s174
    %v810 = vmul.f32 %v709, %v809
    %v811 = vadd.f32 %v808, %v810
    %v812 = vstv %s175
    %v813 = vmul.f32 %v706, %v812
    %v814 = vadd.f32 %v811, %v813
    %v815 = vstv %s176
    %v816 = vmul.f32 %v703, %v815
    %v817 = vadd.f32 %v814, %v816
    %v818 = vstv %s177
    %v819 = vmul.f32 %v700, %v818
    %v820 = vadd.f32 %v817, %v819
    %v821 = vstv %s178
    %v822 = vmul.f32 %v697, %v821
    %v823 = vadd.f32 %v820, %v822
    %v824 = vstv %s179
    %v825 = vmul.f32 %v670, %v824
    %v826 = vadd.f32 %v823, %v825
    %v827 = vstv %s181
    %v828 = vadd.f32 %v826, %v827
    %v829 = vadd.f32 %v773, %v240
    %v830 = vadd.f32 %v829, %v320
    %v831 = vadd.f32 %v828, %v268
    %v832 = vadd.f32 %v831, %v348
    %833 = vst [vmem:[#allocation5] sm:$0x3] %v830
    %v834 = vmul.f32 %v832, 0.5
    %v835 = vmul.f32 %v834, 1.442695
    %v836 = vpow.pop %v835
    %837 = vst [vmem:[#allocation6] sm:$0x3] %v836
    // Predicated region
    $region14: #{network_noise2_forward.1} parent=1 // pred_check
      _
    $region15: #{network_noise2_forward.1} parent=1 // pred_check_branch
      %839 = sbr.rel (0) target = $region17
    $region16: #{network_noise2_forward.1} parent=1 // pred_region
      %s841 = ssub.s32 32, 32
      %842 = vsyncadd [#allocation3], %s841
      %s844 = sshll.u32 [#allocation5], 4
      %s845 = int_to_ptr.vmem [resolvable:$true] %s844
      %847 = dma.vmem_to_hbm [thread:$0]  %s845, 32, %s2, [#allocation3]
    $region17: #{network_noise2_forward.1} parent=1 // pred_fallthru
      _
    // Predicated region
    $region18: #{network_noise2_forward.1} parent=1 // pred_check
      _
    $region19: #{network_noise2_forward.1} parent=1 // pred_check_branch
      %849 = sbr.rel (0) target = $region21
    $region20: #{network_noise2_forward.1} parent=1 // pred_region
      %s851 = ssub.s32 32, 32
      %852 = vsyncadd [#allocation7], %s851
      %s854 = sshll.u32 [#allocation6], 4
      %s855 = int_to_ptr.vmem [resolvable:$true] %s854
      %857 = dma.vmem_to_hbm [thread:$0]  %s855, 32, %s3, [#allocation7]
    $region21: #{network_noise2_forward.1} parent=1 // pred_fallthru
      _
    // Predicated region
    $region22: #{network_noise2_forward.1} parent=1 // pred_check
      _
    $region23: #{network_noise2_forward.1} parent=1 // pred_check_branch
      %859 = sbr.rel (0) target = $region25
    $region24: #{network_noise2_forward.1} parent=1 // pred_region
      %860 = dma.done [#allocation3], 32
    $region25: #{network_noise2_forward.1} parent=1 // pred_fallthru
      _
    // Predicated region
    $region26: #{network_noise2_forward.1} parent=1 // pred_check
      _
    $region27: #{network_noise2_forward.1} parent=1 // pred_check_branch
      %862 = sbr.rel (0) target = $region29
    $region28: #{network_noise2_forward.1} parent=1 // pred_region
      %863 = dma.done [#allocation7], 32
    $region29: #{network_noise2_forward.1} parent=1 // pred_fallthru
      _
    %864 = vsyncpa [#allocation3], 1
    %865 = vsyncpa [#allocation7], 1
    %866 = vsyncpa [#allocation4], 1

</llo_original>
